<compile_context>
chip_gen: v5e
topology: v5e:2x2
jax: 0.10.0
libtpu: 0.0.40
codegen_flags: <defaults>
</compile_context>

<pallas_src>
import numpy as np
import jax
import jax.numpy as jnp
from jax import lax
from jax.experimental import pallas as pl
from jax.experimental.pallas import tpu as pltpu

# ----------------------------- config (small) -------------------------------
B = 2                # batch
T = 8                # sequence length
C = 128              # n_embd  (lane-dense: multiple of 128)
N_HEAD = 4           # n_head
D = C // N_HEAD      # head dim = 32
D2 = D // 2          # rotate-half split = 16
HID = 4 * C          # MLP hidden = 512
EPS = 1e-5
# TODO(synk): dropout with p>0 (training mode) is not implemented; p=0 -> identity.
# TODO(synk): cross-attention path (self_attention=False, mems) not implemented.
# TODO(synk): attn_mask specialized to the causal mask generated in-kernel.


# --------------------------- helpers (in-kernel) ------------------------------
def _layernorm(x, w, b):
    mu = jnp.mean(x, axis=-1, keepdims=True)
    xc = x - mu
    var = jnp.mean(xc * xc, axis=-1, keepdims=True)
    return xc * lax.rsqrt(var + EPS) * w + b


def _gelu_erf(x):
    # Exact GELU 0.5*x*(1+erf(x/sqrt(2))); erf via Abramowitz-Stegun 7.1.26
    # (max |err| ~ 1.5e-7 -> matches PyTorch nn.GELU() default far below test tol).
    z = x * 0.7071067811865476
    az = jnp.abs(z)
    t = 1.0 / (1.0 + 0.3275911 * az)
    poly = ((((1.061405429 * t - 1.453152027) * t + 1.421413741) * t
             - 0.284496736) * t + 0.254829592) * t
    erf_abs = 1.0 - poly * jnp.exp(-az * az)
    erf_z = jnp.where(z >= 0.0, erf_abs, -erf_abs)
    return 0.5 * x * (1.0 + erf_z)


def _rope_all_heads(u, cos_full, sin_a, sin_b):
    # Per-head rotate-half RoPE applied to the full (T, C) slab in one pass.
    # sin_a multiplies roll(u, -D/2) (only live on first-half columns, sign folded),
    # sin_b multiplies roll(u, +D/2) (only live on second-half columns).
    return (u * cos_full
            + jnp.roll(u, -D2, axis=-1) * sin_a
            + jnp.roll(u, D2, axis=-1) * sin_b)


# --------------------------- fused Block kernel ------------------------------
def block_kernel(x_ref,
                 ln1_w_ref, ln1_b_ref,
                 w_attn_ref, b_attn_ref,
                 w_proj_ref, b_proj_ref,
                 ln2_w_ref, ln2_b_ref,
                 w_fc_ref, b_fc_ref,
                 w_fc2_ref, b_fc2_ref,
                 cos_ref, sin_a_ref, sin_b_ref,
                 o_ref):
    bf16 = jnp.bfloat16
    x = x_ref[0]                         # (T, C) f32
    cos_full = cos_ref[...]              # (T, C)
    sin_a = sin_a_ref[...]               # (T, C)
    sin_b = sin_b_ref[...]               # (T, C)

    # ---------------- ln_1 (f32) ----------------
    h = _layernorm(x, ln1_w_ref[...], ln1_b_ref[...])

    # ---------------- c_attn: (T,C) @ (C,3C) + b (bf16 operands, f32 acc) ----
    qkv = jnp.dot(h.astype(bf16), w_attn_ref[...],
                  preferred_element_type=jnp.float32) + b_attn_ref[...]
    q_all = qkv[:, :C] * (float(D) ** -0.5)      # 1/sqrt(D) folded into q
    k_all = qkv[:, C:2 * C]
    v_all = qkv[:, 2 * C:].astype(bf16)

    # ---------------- RoPE, vectorized over all heads (f32 VPU) -------------
    q_rot = _rope_all_heads(q_all, cos_full, sin_a, sin_b).astype(bf16)
    k_rot = _rope_all_heads(k_all, cos_full, sin_a, sin_b).astype(bf16)

    # causal mask built in-kernel (row >= col) -- no HBM mask operand
    row = lax.broadcasted_iota(jnp.int32, (T, T), 0)
    col = lax.broadcasted_iota(jnp.int32, (T, T), 1)
    keep = row >= col

    # ---------------- per-head attention (one K=D matmul each) --------------
    y_heads = []
    for hh in range(N_HEAD):             # static unroll, N_HEAD is tiny
        lo, hi = hh * D, (hh + 1) * D
        s = lax.dot_general(q_rot[:, lo:hi], k_rot[:, lo:hi],
                            (((1,), (1,)), ((), ())),
                            preferred_element_type=jnp.float32)       # (T, T)
        s = jnp.where(keep, s, jnp.float32(-1e30))

        # attention sink: softmax over [s, 0] along keys, drop the zero column
        m = jnp.maximum(jnp.max(s, axis=-1, keepdims=True), 0.0)
        p = jnp.exp(s - m)
        denom = jnp.sum(p, axis=-1, keepdims=True) + jnp.exp(-m)
        attn_w = p * pl.reciprocal(denom, approx=True)                # EUP divide

        y_heads.append(jnp.dot(attn_w.astype(bf16), v_all[:, lo:hi],
                               preferred_element_type=jnp.float32))   # (T, D)

    y_cat = jnp.concatenate(y_heads, axis=-1).astype(bf16)            # (T, C)

    # ---------------- single c_proj + residual ----------------
    x1 = x + jnp.dot(y_cat, w_proj_ref[...],
                     preferred_element_type=jnp.float32) + b_proj_ref[...]

    # ---------------- ln_2 + MLP + residual ----------------
    h2 = _layernorm(x1, ln2_w_ref[...], ln2_b_ref[...])
    m1 = jnp.dot(h2.astype(bf16), w_fc_ref[...],
                 preferred_element_type=jnp.float32) + b_fc_ref[...]
    m1 = _gelu_erf(m1)                                                 # exact GELU
    m2 = jnp.dot(m1.astype(bf16), w_fc2_ref[...],
                 preferred_element_type=jnp.float32) + b_fc2_ref[...]

    o_ref[0] = (x1 + m2).astype(o_ref.dtype)


def block_forward(x, params, cos_full, sin_a, sin_b):
    (ln1_w, ln1_b, W_attn, b_attn, W_proj, b_proj,
     ln2_w, ln2_b, W_fc, b_fc, W_fc2, b_fc2) = params
    Bx, Tx, Cx = x.shape
    bf16 = jnp.bfloat16

    # bf16 weights at the pallas_call boundary: halves weight DMA bytes & VMEM.
    args = (x,
            ln1_w, ln1_b,
            W_attn.astype(bf16), b_attn,
            W_proj.astype(bf16), b_proj,
            ln2_w, ln2_b,
            W_fc.astype(bf16), b_fc,
            W_fc2.astype(bf16), b_fc2,
            cos_full, sin_a, sin_b)

    def full(arr):
        return pl.BlockSpec(arr.shape, lambda b: (0,) * arr.ndim)

    in_specs = [pl.BlockSpec((1, Tx, Cx), lambda b: (b, 0, 0))] + \
               [full(a) for a in args[1:]]

    return pl.pallas_call(
        block_kernel,
        out_shape=jax.ShapeDtypeStruct((Bx, Tx, Cx), x.dtype),
        grid=(Bx,),                                   # 2 parallel steps (v7x megacore)
        in_specs=in_specs,
        out_specs=pl.BlockSpec((1, Tx, Cx), lambda b: (b, 0, 0)),
        compiler_params=pltpu.CompilerParams(
            dimension_semantics=("parallel",)),
    )(*args)


# ------------------------------ RoPE tables ----------------------------------
def rope_tables(seq_len, head_dim, n_head):
    inv_freq = 1.0 / (10000.0 ** (jnp.arange(0, head_dim, 2, dtype=jnp.float32)
                                  / head_dim))
    t = jnp.arange(seq_len, dtype=jnp.float32)
    freqs = jnp.outer(t, inv_freq)                     # (T, D/2)
    emb = jnp.concatenate([freqs, freqs], axis=-1)     # (T, D)
    cos_t, sin_t = jnp.cos(emb), jnp.sin(emb)

    d2 = head_dim // 2
    first = jnp.arange(head_dim) < d2                  # (D,)
    # Per-head tiled (T, C) tables with sign/half masks folded (see kernel RoPE).
    cos_full = jnp.tile(cos_t, (1, n_head))                            # (T, C)
    sin_a = jnp.tile(jnp.where(first, -sin_t, 0.0), (1, n_head))       # * roll(u,-D/2)
    sin_b = jnp.tile(jnp.where(first, 0.0, sin_t), (1, n_head))        # * roll(u,+D/2)
    return cos_t, sin_t, cos_full, sin_a, sin_b


# ------------------------------ pure-JAX reference ---------------------------
def ref_layernorm(x, w, b):
    mu = x.mean(-1, keepdims=True)
    var = ((x - mu) ** 2).mean(-1, keepdims=True)
    return (x - mu) / jnp.sqrt(var + EPS) * w + b


def ref_rope(x, cos, sin):
    d2 = x.shape[-1] // 2
    x1, x2 = x[..., :d2], x[..., d2:]
    rot = jnp.concatenate([-x2, x1], axis=-1)
    return x * cos + rot * sin


def reference_block(x, params, cos, sin, mask_bool):
    (ln1_w, ln1_b, W_attn, b_attn, W_proj, b_proj,
     ln2_w, ln2_b, W_fc, b_fc, W_fc2, b_fc2) = params
    Bx, Tx, Cx = x.shape
    H, Dh = N_HEAD, Cx // N_HEAD

    h = ref_layernorm(x, ln1_w[0], ln1_b[0])
    qkv = h @ W_attn + b_attn[0]
    q, k, v = jnp.split(qkv, 3, axis=2)

    def to_heads(t):
        return t.reshape(Bx, Tx, H, Dh).transpose(0, 2, 1, 3)

    q, k, v = to_heads(q), to_heads(k), to_heads(v)
    q, k = ref_rope(q, cos, sin), ref_rope(k, cos, sin)

    w = jnp.einsum('bhtd,bhsd->bhts', q, k) * (Dh ** -0.5)
    w = jnp.where(mask_bool, w, -jnp.inf)
    w = jnp.concatenate([w, jnp.zeros((Bx, H, Tx, 1), w.dtype)], axis=-1)
    w = jax.nn.softmax(w, axis=-1)[..., :-1]
    y = jnp.einsum('bhts,bhsd->bhtd', w, v)
    y = y.transpose(0, 2, 1, 3).reshape(Bx, Tx, Cx)
    x1 = x + (y @ W_proj + b_proj[0])

    h2 = ref_layernorm(x1, ln2_w[0], ln2_b[0])
    m1 = h2 @ W_fc + b_fc[0]
    m1 = jax.nn.gelu(m1, approximate=False)            # exact erf GELU (PyTorch default)
    m2 = m1 @ W_fc2 + b_fc2[0]
    return x1 + m2


# ------------------------------------ main -----------------------------------
if __name__ == "__main__":
    key = jax.random.PRNGKey(0)
    ks = jax.random.split(key, 13)

    # Weights stored as (in, out) = transpose of PyTorch nn.Linear.weight.
    W_attn = 0.02 * jax.random.normal(ks[0], (C, 3 * C), jnp.float32)
    b_attn = 0.02 * jax.random.normal(ks[1], (1, 3 * C), jnp.float32)
    W_proj = 0.02 * jax.random.normal(ks[2], (C, C), jnp.float32)
    b_proj = 0.02 * jax.random.normal(ks[3], (1, C), jnp.float32)
    W_fc   = 0.02 * jax.random.normal(ks[4], (C, HID), jnp.float32)
    b_fc   = 0.02 * jax.random.normal(ks[5], (1, HID), jnp.float32)
    W_fc2  = 0.02 * jax.random.normal(ks[6], (HID, C), jnp.float32)
    b_fc2  = 0.02 * jax.random.normal(ks[7], (1, C), jnp.float32)
    ln1_w = 1.0 + 0.1 * jax.random.normal(ks[8], (1, C), jnp.float32)
    ln1_b = 0.1 * jax.random.normal(ks[9], (1, C), jnp.float32)
    ln2_w = 1.0 + 0.1 * jax.random.normal(ks[10], (1, C), jnp.float32)
    ln2_b = 0.1 * jax.random.normal(ks[11], (1, C), jnp.float32)

    x = jax.random.normal(ks[12], (B, T, C), jnp.float32)
    cos_t, sin_t, cos_full, sin_a, sin_b = rope_tables(T, D, N_HEAD)

    params = (ln1_w, ln1_b, W_attn, b_attn, W_proj, b_proj,
              ln2_w, ln2_b, W_fc, b_fc, W_fc2, b_fc2)

    out = block_forward(x, params, cos_full, sin_a, sin_b)
    out = jax.block_until_ready(out)

    mask_bool = jnp.tril(jnp.ones((T, T), dtype=bool))   # causal (True = keep)
    ref = reference_block(x, params, cos_t, sin_t, mask_bool)
    np.testing.assert_allclose(np.asarray(out), np.asarray(ref),
                               rtol=2e-2, atol=2e-2)

    print("KERNEL_OK")
</pallas_src>

<mosaic_0001>
module attributes {stable_mosaic.version = 11 : i64} {
  func.func @block_kernel(%arg0: i32, %arg1: memref<1x8x128xf32, #tpu.memory_space<vmem>>, %arg2: memref<1x128xf32, #tpu.memory_space<vmem>>, %arg3: memref<1x128xf32, #tpu.memory_space<vmem>>, %arg4: memref<128x384xbf16, #tpu.memory_space<vmem>>, %arg5: memref<1x384xf32, #tpu.memory_space<vmem>>, %arg6: memref<128x128xbf16, #tpu.memory_space<vmem>>, %arg7: memref<1x128xf32, #tpu.memory_space<vmem>>, %arg8: memref<1x128xf32, #tpu.memory_space<vmem>>, %arg9: memref<1x128xf32, #tpu.memory_space<vmem>>, %arg10: memref<128x512xbf16, #tpu.memory_space<vmem>>, %arg11: memref<1x512xf32, #tpu.memory_space<vmem>>, %arg12: memref<512x128xbf16, #tpu.memory_space<vmem>>, %arg13: memref<1x128xf32, #tpu.memory_space<vmem>>, %arg14: memref<8x128xf32, #tpu.memory_space<vmem>>, %arg15: memref<8x128xf32, #tpu.memory_space<vmem>>, %arg16: memref<8x128xf32, #tpu.memory_space<vmem>>, %arg17: memref<1x8x128xf32, #tpu.memory_space<vmem>>) attributes {dimension_semantics = [#tpu.dimension_semantics<parallel>], iteration_bounds = array<i64: 2>, scalar_prefetch = 0 : i64, scratch_operands = 0 : i64, tpu.core_type = #tpu.core_type<tc>, window_params = [{transform_indices = @transform_0, window_bounds = array<i64: 1, 8, 128>}, {pipeline_mode = #tpu.pipeline_mode<synchronous>, transform_indices = @transform_1, window_bounds = array<i64: 1, 128>}, {pipeline_mode = #tpu.pipeline_mode<synchronous>, transform_indices = @transform_2, window_bounds = array<i64: 1, 128>}, {pipeline_mode = #tpu.pipeline_mode<synchronous>, transform_indices = @transform_3, window_bounds = array<i64: 128, 384>}, {pipeline_mode = #tpu.pipeline_mode<synchronous>, transform_indices = @transform_4, window_bounds = array<i64: 1, 384>}, {pipeline_mode = #tpu.pipeline_mode<synchronous>, transform_indices = @transform_5, window_bounds = array<i64: 128, 128>}, {pipeline_mode = #tpu.pipeline_mode<synchronous>, transform_indices = @transform_6, window_bounds = array<i64: 1, 128>}, {pipeline_mode = #tpu.pipeline_mode<synchronous>, transform_indices = @transform_7, window_bounds = array<i64: 1, 128>}, {pipeline_mode = #tpu.pipeline_mode<synchronous>, transform_indices = @transform_8, window_bounds = array<i64: 1, 128>}, {pipeline_mode = #tpu.pipeline_mode<synchronous>, transform_indices = @transform_9, window_bounds = array<i64: 128, 512>}, {pipeline_mode = #tpu.pipeline_mode<synchronous>, transform_indices = @transform_10, window_bounds = array<i64: 1, 512>}, {pipeline_mode = #tpu.pipeline_mode<synchronous>, transform_indices = @transform_11, window_bounds = array<i64: 512, 128>}, {pipeline_mode = #tpu.pipeline_mode<synchronous>, transform_indices = @transform_12, window_bounds = array<i64: 1, 128>}, {pipeline_mode = #tpu.pipeline_mode<synchronous>, transform_indices = @transform_13, window_bounds = array<i64: 8, 128>}, {pipeline_mode = #tpu.pipeline_mode<synchronous>, transform_indices = @transform_14, window_bounds = array<i64: 8, 128>}, {pipeline_mode = #tpu.pipeline_mode<synchronous>, transform_indices = @transform_15, window_bounds = array<i64: 8, 128>}, {transform_indices = @transform_16, window_bounds = array<i64: 1, 8, 128>}]} {
    %c0 = arith.constant 0 : index
    %c0_0 = arith.constant 0 : index
    %c0_1 = arith.constant 0 : index
    %0 = vector.load %arg1[%c0, %c0_0, %c0_1] : memref<1x8x128xf32, #tpu.memory_space<vmem>>, vector<1x8x128xf32>
    %1 = vector.shape_cast %0 : vector<1x8x128xf32> to vector<8x128xf32>
    %c0_2 = arith.constant 0 : index
    %c0_3 = arith.constant 0 : index
    %2 = vector.load %arg14[%c0_2, %c0_3] : memref<8x128xf32, #tpu.memory_space<vmem>>, vector<8x128xf32>
    %c0_4 = arith.constant 0 : index
    %c0_5 = arith.constant 0 : index
    %3 = vector.load %arg15[%c0_4, %c0_5] : memref<8x128xf32, #tpu.memory_space<vmem>>, vector<8x128xf32>
    %c0_6 = arith.constant 0 : index
    %c0_7 = arith.constant 0 : index
    %4 = vector.load %arg16[%c0_6, %c0_7] : memref<8x128xf32, #tpu.memory_space<vmem>>, vector<8x128xf32>
    %c0_8 = arith.constant 0 : index
    %c0_9 = arith.constant 0 : index
    %5 = vector.load %arg2[%c0_8, %c0_9] : memref<1x128xf32, #tpu.memory_space<vmem>>, vector<1x128xf32>
    %c0_10 = arith.constant 0 : index
    %c0_11 = arith.constant 0 : index
    %6 = vector.load %arg3[%c0_10, %c0_11] : memref<1x128xf32, #tpu.memory_space<vmem>>, vector<1x128xf32>
    %cst = arith.constant dense<0.000000e+00> : vector<8xf32>
    %7 = vector.multi_reduction <add>, %1, %cst [1] : vector<8x128xf32> to vector<8xf32>
    %8 = vector.shape_cast %7 : vector<8xf32> to vector<8x1xf32>
    %cst_12 = arith.constant 1.280000e+02 : f32
    %9 = vector.broadcast %cst_12 : f32 to vector<8x1xf32>
    %10 = arith.divf %8, %9 : vector<8x1xf32>
    %11 = vector.broadcast %10 : vector<8x1xf32> to vector<8x128xf32>
    %12 = arith.subf %1, %11 : vector<8x128xf32>
    %13 = arith.mulf %12, %12 : vector<8x128xf32>
    %cst_13 = arith.constant dense<0.000000e+00> : vector<8xf32>
    %14 = vector.multi_reduction <add>, %13, %cst_13 [1] : vector<8x128xf32> to vector<8xf32>
    %15 = vector.shape_cast %14 : vector<8xf32> to vector<8x1xf32>
    %cst_14 = arith.constant 1.280000e+02 : f32
    %16 = vector.broadcast %cst_14 : f32 to vector<8x1xf32>
    %17 = arith.divf %15, %16 : vector<8x1xf32>
    %cst_15 = arith.constant 9.99999974E-6 : f32
    %18 = vector.broadcast %cst_15 : f32 to vector<8x1xf32>
    %19 = arith.addf %17, %18 : vector<8x1xf32>
    %20 = math.rsqrt %19 : vector<8x1xf32>
    %21 = vector.broadcast %20 : vector<8x1xf32> to vector<8x128xf32>
    %22 = arith.mulf %12, %21 : vector<8x128xf32>
    %23 = vector.broadcast %5 : vector<1x128xf32> to vector<8x128xf32>
    %24 = arith.mulf %22, %23 : vector<8x128xf32>
    %25 = vector.broadcast %6 : vector<1x128xf32> to vector<8x128xf32>
    %26 = arith.addf %24, %25 : vector<8x128xf32>
    %27 = arith.truncf %26 : vector<8x128xf32> to vector<8x128xbf16>
    %c0_16 = arith.constant 0 : index
    %c0_17 = arith.constant 0 : index
    %28 = vector.load %arg4[%c0_16, %c0_17] : memref<128x384xbf16, #tpu.memory_space<vmem>>, vector<128x384xbf16>
    %cst_18 = arith.constant dense<0.000000e+00> : vector<8x384xf32>
    %29 = tpu.matmul %27, %28, %cst_18 {dimension_numbers = #tpu.dot_dimension_numbers<[1], [0], [0], [1], [0, 0, 1, 1], [], []>} : vector<8x128xbf16>, vector<128x384xbf16>, vector<8x384xf32> -> vector<8x384xf32>
    %c0_19 = arith.constant 0 : index
    %c0_20 = arith.constant 0 : index
    %30 = vector.load %arg5[%c0_19, %c0_20] : memref<1x384xf32, #tpu.memory_space<vmem>>, vector<1x384xf32>
    %31 = vector.broadcast %30 : vector<1x384xf32> to vector<8x384xf32>
    %32 = arith.addf %29, %31 : vector<8x384xf32>
    %33 = vector.extract_strided_slice %32 {offsets = [0, 0], sizes = [8, 128], strides = [1, 1]} : vector<8x384xf32> to vector<8x128xf32>
    %cst_21 = arith.constant 0.176776692 : f32
    %34 = vector.broadcast %cst_21 : f32 to vector<8x128xf32>
    %35 = arith.mulf %33, %34 : vector<8x128xf32>
    %36 = vector.extract_strided_slice %32 {offsets = [0, 128], sizes = [8, 128], strides = [1, 1]} : vector<8x384xf32> to vector<8x128xf32>
    %37 = vector.extract_strided_slice %32 {offsets = [0, 256], sizes = [8, 128], strides = [1, 1]} : vector<8x384xf32> to vector<8x128xf32>
    %38 = arith.truncf %37 : vector<8x128xf32> to vector<8x128xbf16>
    %39 = arith.mulf %35, %2 : vector<8x128xf32>
    %40 = vector.extract_strided_slice %35 {offsets = [0, 16], sizes = [8, 112], strides = [1, 1]} : vector<8x128xf32> to vector<8x112xf32>
    %41 = vector.extract_strided_slice %35 {offsets = [0, 0], sizes = [8, 16], strides = [1, 1]} : vector<8x128xf32> to vector<8x16xf32>
    %42 = tpu.concatenate %40, %41 in 1 : vector<8x112xf32>, vector<8x16xf32> -> vector<8x128xf32>
    %43 = arith.mulf %42, %3 : vector<8x128xf32>
    %44 = arith.addf %39, %43 : vector<8x128xf32>
    %45 = vector.extract_strided_slice %35 {offsets = [0, 112], sizes = [8, 16], strides = [1, 1]} : vector<8x128xf32> to vector<8x16xf32>
    %46 = vector.extract_strided_slice %35 {offsets = [0, 0], sizes = [8, 112], strides = [1, 1]} : vector<8x128xf32> to vector<8x112xf32>
    %47 = tpu.concatenate %45, %46 in 1 : vector<8x16xf32>, vector<8x112xf32> -> vector<8x128xf32>
    %48 = arith.mulf %47, %4 : vector<8x128xf32>
    %49 = arith.addf %44, %48 : vector<8x128xf32>
    %50 = arith.truncf %49 : vector<8x128xf32> to vector<8x128xbf16>
    %51 = arith.mulf %36, %2 : vector<8x128xf32>
    %52 = vector.extract_strided_slice %36 {offsets = [0, 16], sizes = [8, 112], strides = [1, 1]} : vector<8x128xf32> to vector<8x112xf32>
    %53 = vector.extract_strided_slice %36 {offsets = [0, 0], sizes = [8, 16], strides = [1, 1]} : vector<8x128xf32> to vector<8x16xf32>
    %54 = tpu.concatenate %52, %53 in 1 : vector<8x112xf32>, vector<8x16xf32> -> vector<8x128xf32>
    %55 = arith.mulf %54, %3 : vector<8x128xf32>
    %56 = arith.addf %51, %55 : vector<8x128xf32>
    %57 = vector.extract_strided_slice %36 {offsets = [0, 112], sizes = [8, 16], strides = [1, 1]} : vector<8x128xf32> to vector<8x16xf32>
    %58 = vector.extract_strided_slice %36 {offsets = [0, 0], sizes = [8, 112], strides = [1, 1]} : vector<8x128xf32> to vector<8x112xf32>
    %59 = tpu.concatenate %57, %58 in 1 : vector<8x16xf32>, vector<8x112xf32> -> vector<8x128xf32>
    %60 = arith.mulf %59, %4 : vector<8x128xf32>
    %61 = arith.addf %56, %60 : vector<8x128xf32>
    %62 = arith.truncf %61 : vector<8x128xf32> to vector<8x128xbf16>
    %63 = tpu.iota {dimensions = array<i32: 0>} : vector<8x8xi32>
    %64 = tpu.iota {dimensions = array<i32: 1>} : vector<8x8xi32>
    %65 = arith.cmpi sge, %63, %64 : vector<8x8xi32>
    %66 = vector.extract_strided_slice %50 {offsets = [0, 0], sizes = [8, 32], strides = [1, 1]} : vector<8x128xbf16> to vector<8x32xbf16>
    %67 = vector.extract_strided_slice %62 {offsets = [0, 0], sizes = [8, 32], strides = [1, 1]} : vector<8x128xbf16> to vector<8x32xbf16>
    %cst_22 = arith.constant dense<0.000000e+00> : vector<8x8xf32>
    %68 = tpu.matmul %66, %67, %cst_22 {dimension_numbers = #tpu.dot_dimension_numbers<[1], [1], [0], [0], [0, 0, 1, 0], [], []>} : vector<8x32xbf16>, vector<8x32xbf16>, vector<8x8xf32> -> vector<8x8xf32>
    %cst_23 = arith.constant -1.000000e+30 : f32
    %69 = vector.broadcast %cst_23 : f32 to vector<8x8xf32>
    %70 = arith.select %65, %68, %69 : vector<8x8xi1>, vector<8x8xf32>
    %cst_24 = arith.constant dense<0xFF800000> : vector<8xf32>
    %71 = vector.multi_reduction <maximumf>, %70, %cst_24 [1] : vector<8x8xf32> to vector<8xf32>
    %72 = vector.shape_cast %71 : vector<8xf32> to vector<8x1xf32>
    %cst_25 = arith.constant 0.000000e+00 : f32
    %73 = vector.broadcast %cst_25 : f32 to vector<8x1xf32>
    %74 = arith.maximumf %72, %73 : vector<8x1xf32>
    %75 = vector.broadcast %74 : vector<8x1xf32> to vector<8x8xf32>
    %76 = arith.subf %70, %75 : vector<8x8xf32>
    %77 = math.exp %76 : vector<8x8xf32>
    %cst_26 = arith.constant dense<0.000000e+00> : vector<8xf32>
    %78 = vector.multi_reduction <add>, %77, %cst_26 [1] : vector<8x8xf32> to vector<8xf32>
    %79 = vector.shape_cast %78 : vector<8xf32> to vector<8x1xf32>
    %cst_27 = arith.constant 0.000000e+00 : f32
    %80 = vector.broadcast %cst_27 : f32 to vector<8x1xf32>
    %81 = arith.subf %80, %74 : vector<8x1xf32>
    %82 = math.exp %81 : vector<8x1xf32>
    %83 = arith.addf %79, %82 : vector<8x1xf32>
    %84 = tpu.reciprocal %83 {approx = true} : vector<8x1xf32> -> vector<8x1xf32>
    %85 = vector.broadcast %84 : vector<8x1xf32> to vector<8x8xf32>
    %86 = arith.mulf %77, %85 : vector<8x8xf32>
    %87 = arith.truncf %86 : vector<8x8xf32> to vector<8x8xbf16>
    %88 = vector.extract_strided_slice %38 {offsets = [0, 0], sizes = [8, 32], strides = [1, 1]} : vector<8x128xbf16> to vector<8x32xbf16>
    %cst_28 = arith.constant dense<0.000000e+00> : vector<8x32xf32>
    %89 = tpu.matmul %87, %88, %cst_28 {dimension_numbers = #tpu.dot_dimension_numbers<[1], [0], [0], [1], [0, 0, 1, 1], [], []>} : vector<8x8xbf16>, vector<8x32xbf16>, vector<8x32xf32> -> vector<8x32xf32>
    %90 = vector.extract_strided_slice %50 {offsets = [0, 32], sizes = [8, 32], strides = [1, 1]} : vector<8x128xbf16> to vector<8x32xbf16>
    %91 = vector.extract_strided_slice %62 {offsets = [0, 32], sizes = [8, 32], strides = [1, 1]} : vector<8x128xbf16> to vector<8x32xbf16>
    %cst_29 = arith.constant dense<0.000000e+00> : vector<8x8xf32>
    %92 = tpu.matmul %90, %91, %cst_29 {dimension_numbers = #tpu.dot_dimension_numbers<[1], [1], [0], [0], [0, 0, 1, 0], [], []>} : vector<8x32xbf16>, vector<8x32xbf16>, vector<8x8xf32> -> vector<8x8xf32>
    %cst_30 = arith.constant -1.000000e+30 : f32
    %93 = vector.broadcast %cst_30 : f32 to vector<8x8xf32>
    %94 = arith.select %65, %92, %93 : vector<8x8xi1>, vector<8x8xf32>
    %cst_31 = arith.constant dense<0xFF800000> : vector<8xf32>
    %95 = vector.multi_reduction <maximumf>, %94, %cst_31 [1] : vector<8x8xf32> to vector<8xf32>
    %96 = vector.shape_cast %95 : vector<8xf32> to vector<8x1xf32>
    %cst_32 = arith.constant 0.000000e+00 : f32
    %97 = vector.broadcast %cst_32 : f32 to vector<8x1xf32>
    %98 = arith.maximumf %96, %97 : vector<8x1xf32>
    %99 = vector.broadcast %98 : vector<8x1xf32> to vector<8x8xf32>
    %100 = arith.subf %94, %99 : vector<8x8xf32>
    %101 = math.exp %100 : vector<8x8xf32>
    %cst_33 = arith.constant dense<0.000000e+00> : vector<8xf32>
    %102 = vector.multi_reduction <add>, %101, %cst_33 [1] : vector<8x8xf32> to vector<8xf32>
    %103 = vector.shape_cast %102 : vector<8xf32> to vector<8x1xf32>
    %cst_34 = arith.constant 0.000000e+00 : f32
    %104 = vector.broadcast %cst_34 : f32 to vector<8x1xf32>
    %105 = arith.subf %104, %98 : vector<8x1xf32>
    %106 = math.exp %105 : vector<8x1xf32>
    %107 = arith.addf %103, %106 : vector<8x1xf32>
    %108 = tpu.reciprocal %107 {approx = true} : vector<8x1xf32> -> vector<8x1xf32>
    %109 = vector.broadcast %108 : vector<8x1xf32> to vector<8x8xf32>
    %110 = arith.mulf %101, %109 : vector<8x8xf32>
    %111 = arith.truncf %110 : vector<8x8xf32> to vector<8x8xbf16>
    %112 = vector.extract_strided_slice %38 {offsets = [0, 32], sizes = [8, 32], strides = [1, 1]} : vector<8x128xbf16> to vector<8x32xbf16>
    %cst_35 = arith.constant dense<0.000000e+00> : vector<8x32xf32>
    %113 = tpu.matmul %111, %112, %cst_35 {dimension_numbers = #tpu.dot_dimension_numbers<[1], [0], [0], [1], [0, 0, 1, 1], [], []>} : vector<8x8xbf16>, vector<8x32xbf16>, vector<8x32xf32> -> vector<8x32xf32>
    %114 = vector.extract_strided_slice %50 {offsets = [0, 64], sizes = [8, 32], strides = [1, 1]} : vector<8x128xbf16> to vector<8x32xbf16>
    %115 = vector.extract_strided_slice %62 {offsets = [0, 64], sizes = [8, 32], strides = [1, 1]} : vector<8x128xbf16> to vector<8x32xbf16>
    %cst_36 = arith.constant dense<0.000000e+00> : vector<8x8xf32>
    %116 = tpu.matmul %114, %115, %cst_36 {dimension_numbers = #tpu.dot_dimension_numbers<[1], [1], [0], [0], [0, 0, 1, 0], [], []>} : vector<8x32xbf16>, vector<8x32xbf16>, vector<8x8xf32> -> vector<8x8xf32>
    %cst_37 = arith.constant -1.000000e+30 : f32
    %117 = vector.broadcast %cst_37 : f32 to vector<8x8xf32>
    %118 = arith.select %65, %116, %117 : vector<8x8xi1>, vector<8x8xf32>
    %cst_38 = arith.constant dense<0xFF800000> : vector<8xf32>
    %119 = vector.multi_reduction <maximumf>, %118, %cst_38 [1] : vector<8x8xf32> to vector<8xf32>
    %120 = vector.shape_cast %119 : vector<8xf32> to vector<8x1xf32>
    %cst_39 = arith.constant 0.000000e+00 : f32
    %121 = vector.broadcast %cst_39 : f32 to vector<8x1xf32>
    %122 = arith.maximumf %120, %121 : vector<8x1xf32>
    %123 = vector.broadcast %122 : vector<8x1xf32> to vector<8x8xf32>
    %124 = arith.subf %118, %123 : vector<8x8xf32>
    %125 = math.exp %124 : vector<8x8xf32>
    %cst_40 = arith.constant dense<0.000000e+00> : vector<8xf32>
    %126 = vector.multi_reduction <add>, %125, %cst_40 [1] : vector<8x8xf32> to vector<8xf32>
    %127 = vector.shape_cast %126 : vector<8xf32> to vector<8x1xf32>
    %cst_41 = arith.constant 0.000000e+00 : f32
    %128 = vector.broadcast %cst_41 : f32 to vector<8x1xf32>
    %129 = arith.subf %128, %122 : vector<8x1xf32>
    %130 = math.exp %129 : vector<8x1xf32>
    %131 = arith.addf %127, %130 : vector<8x1xf32>
    %132 = tpu.reciprocal %131 {approx = true} : vector<8x1xf32> -> vector<8x1xf32>
    %133 = vector.broadcast %132 : vector<8x1xf32> to vector<8x8xf32>
    %134 = arith.mulf %125, %133 : vector<8x8xf32>
    %135 = arith.truncf %134 : vector<8x8xf32> to vector<8x8xbf16>
    %136 = vector.extract_strided_slice %38 {offsets = [0, 64], sizes = [8, 32], strides = [1, 1]} : vector<8x128xbf16> to vector<8x32xbf16>
    %cst_42 = arith.constant dense<0.000000e+00> : vector<8x32xf32>
    %137 = tpu.matmul %135, %136, %cst_42 {dimension_numbers = #tpu.dot_dimension_numbers<[1], [0], [0], [1], [0, 0, 1, 1], [], []>} : vector<8x8xbf16>, vector<8x32xbf16>, vector<8x32xf32> -> vector<8x32xf32>
    %138 = vector.extract_strided_slice %50 {offsets = [0, 96], sizes = [8, 32], strides = [1, 1]} : vector<8x128xbf16> to vector<8x32xbf16>
    %139 = vector.extract_strided_slice %62 {offsets = [0, 96], sizes = [8, 32], strides = [1, 1]} : vector<8x128xbf16> to vector<8x32xbf16>
    %cst_43 = arith.constant dense<0.000000e+00> : vector<8x8xf32>
    %140 = tpu.matmul %138, %139, %cst_43 {dimension_numbers = #tpu.dot_dimension_numbers<[1], [1], [0], [0], [0, 0, 1, 0], [], []>} : vector<8x32xbf16>, vector<8x32xbf16>, vector<8x8xf32> -> vector<8x8xf32>
    %cst_44 = arith.constant -1.000000e+30 : f32
    %141 = vector.broadcast %cst_44 : f32 to vector<8x8xf32>
    %142 = arith.select %65, %140, %141 : vector<8x8xi1>, vector<8x8xf32>
    %cst_45 = arith.constant dense<0xFF800000> : vector<8xf32>
    %143 = vector.multi_reduction <maximumf>, %142, %cst_45 [1] : vector<8x8xf32> to vector<8xf32>
    %144 = vector.shape_cast %143 : vector<8xf32> to vector<8x1xf32>
    %cst_46 = arith.constant 0.000000e+00 : f32
    %145 = vector.broadcast %cst_46 : f32 to vector<8x1xf32>
    %146 = arith.maximumf %144, %145 : vector<8x1xf32>
    %147 = vector.broadcast %146 : vector<8x1xf32> to vector<8x8xf32>
    %148 = arith.subf %142, %147 : vector<8x8xf32>
    %149 = math.exp %148 : vector<8x8xf32>
    %cst_47 = arith.constant dense<0.000000e+00> : vector<8xf32>
    %150 = vector.multi_reduction <add>, %149, %cst_47 [1] : vector<8x8xf32> to vector<8xf32>
    %151 = vector.shape_cast %150 : vector<8xf32> to vector<8x1xf32>
    %cst_48 = arith.constant 0.000000e+00 : f32
    %152 = vector.broadcast %cst_48 : f32 to vector<8x1xf32>
    %153 = arith.subf %152, %146 : vector<8x1xf32>
    %154 = math.exp %153 : vector<8x1xf32>
    %155 = arith.addf %151, %154 : vector<8x1xf32>
    %156 = tpu.reciprocal %155 {approx = true} : vector<8x1xf32> -> vector<8x1xf32>
    %157 = vector.broadcast %156 : vector<8x1xf32> to vector<8x8xf32>
    %158 = arith.mulf %149, %157 : vector<8x8xf32>
    %159 = arith.truncf %158 : vector<8x8xf32> to vector<8x8xbf16>
    %160 = vector.extract_strided_slice %38 {offsets = [0, 96], sizes = [8, 32], strides = [1, 1]} : vector<8x128xbf16> to vector<8x32xbf16>
    %cst_49 = arith.constant dense<0.000000e+00> : vector<8x32xf32>
    %161 = tpu.matmul %159, %160, %cst_49 {dimension_numbers = #tpu.dot_dimension_numbers<[1], [0], [0], [1], [0, 0, 1, 1], [], []>} : vector<8x8xbf16>, vector<8x32xbf16>, vector<8x32xf32> -> vector<8x32xf32>
    %162 = tpu.concatenate %89, %113, %137, %161 in 1 : vector<8x32xf32>, vector<8x32xf32>, vector<8x32xf32>, vector<8x32xf32> -> vector<8x128xf32>
    %163 = arith.truncf %162 : vector<8x128xf32> to vector<8x128xbf16>
    %c0_50 = arith.constant 0 : index
    %c0_51 = arith.constant 0 : index
    %164 = vector.load %arg6[%c0_50, %c0_51] : memref<128x128xbf16, #tpu.memory_space<vmem>>, vector<128x128xbf16>
    %cst_52 = arith.constant dense<0.000000e+00> : vector<8x128xf32>
    %165 = tpu.matmul %163, %164, %cst_52 {dimension_numbers = #tpu.dot_dimension_numbers<[1], [0], [0], [1], [0, 0, 1, 1], [], []>} : vector<8x128xbf16>, vector<128x128xbf16>, vector<8x128xf32> -> vector<8x128xf32>
    %166 = arith.addf %1, %165 : vector<8x128xf32>
    %c0_53 = arith.constant 0 : index
    %c0_54 = arith.constant 0 : index
    %167 = vector.load %arg7[%c0_53, %c0_54] : memref<1x128xf32, #tpu.memory_space<vmem>>, vector<1x128xf32>
    %168 = vector.broadcast %167 : vector<1x128xf32> to vector<8x128xf32>
    %169 = arith.addf %166, %168 : vector<8x128xf32>
    %c0_55 = arith.constant 0 : index
    %c0_56 = arith.constant 0 : index
    %170 = vector.load %arg8[%c0_55, %c0_56] : memref<1x128xf32, #tpu.memory_space<vmem>>, vector<1x128xf32>
    %c0_57 = arith.constant 0 : index
    %c0_58 = arith.constant 0 : index
    %171 = vector.load %arg9[%c0_57, %c0_58] : memref<1x128xf32, #tpu.memory_space<vmem>>, vector<1x128xf32>
    %cst_59 = arith.constant dense<0.000000e+00> : vector<8xf32>
    %172 = vector.multi_reduction <add>, %169, %cst_59 [1] : vector<8x128xf32> to vector<8xf32>
    %173 = vector.shape_cast %172 : vector<8xf32> to vector<8x1xf32>
    %cst_60 = arith.constant 1.280000e+02 : f32
    %174 = vector.broadcast %cst_60 : f32 to vector<8x1xf32>
    %175 = arith.divf %173, %174 : vector<8x1xf32>
    %176 = vector.broadcast %175 : vector<8x1xf32> to vector<8x128xf32>
    %177 = arith.subf %169, %176 : vector<8x128xf32>
    %178 = arith.mulf %177, %177 : vector<8x128xf32>
    %cst_61 = arith.constant dense<0.000000e+00> : vector<8xf32>
    %179 = vector.multi_reduction <add>, %178, %cst_61 [1] : vector<8x128xf32> to vector<8xf32>
    %180 = vector.shape_cast %179 : vector<8xf32> to vector<8x1xf32>
    %cst_62 = arith.constant 1.280000e+02 : f32
    %181 = vector.broadcast %cst_62 : f32 to vector<8x1xf32>
    %182 = arith.divf %180, %181 : vector<8x1xf32>
    %cst_63 = arith.constant 9.99999974E-6 : f32
    %183 = vector.broadcast %cst_63 : f32 to vector<8x1xf32>
    %184 = arith.addf %182, %183 : vector<8x1xf32>
    %185 = math.rsqrt %184 : vector<8x1xf32>
    %186 = vector.broadcast %185 : vector<8x1xf32> to vector<8x128xf32>
    %187 = arith.mulf %177, %186 : vector<8x128xf32>
    %188 = vector.broadcast %170 : vector<1x128xf32> to vector<8x128xf32>
    %189 = arith.mulf %187, %188 : vector<8x128xf32>
    %190 = vector.broadcast %171 : vector<1x128xf32> to vector<8x128xf32>
    %191 = arith.addf %189, %190 : vector<8x128xf32>
    %192 = arith.truncf %191 : vector<8x128xf32> to vector<8x128xbf16>
    %c0_64 = arith.constant 0 : index
    %c0_65 = arith.constant 0 : index
    %193 = vector.load %arg10[%c0_64, %c0_65] : memref<128x512xbf16, #tpu.memory_space<vmem>>, vector<128x512xbf16>
    %cst_66 = arith.constant dense<0.000000e+00> : vector<8x512xf32>
    %194 = tpu.matmul %192, %193, %cst_66 {dimension_numbers = #tpu.dot_dimension_numbers<[1], [0], [0], [1], [0, 0, 1, 1], [], []>} : vector<8x128xbf16>, vector<128x512xbf16>, vector<8x512xf32> -> vector<8x512xf32>
    %c0_67 = arith.constant 0 : index
    %c0_68 = arith.constant 0 : index
    %195 = vector.load %arg11[%c0_67, %c0_68] : memref<1x512xf32, #tpu.memory_space<vmem>>, vector<1x512xf32>
    %196 = vector.broadcast %195 : vector<1x512xf32> to vector<8x512xf32>
    %197 = arith.addf %194, %196 : vector<8x512xf32>
    %cst_69 = arith.constant 0.707106769 : f32
    %198 = vector.broadcast %cst_69 : f32 to vector<8x512xf32>
    %199 = arith.mulf %197, %198 : vector<8x512xf32>
    %200 = math.absf %199 : vector<8x512xf32>
    %cst_70 = arith.constant 0.327591091 : f32
    %201 = vector.broadcast %cst_70 : f32 to vector<8x512xf32>
    %202 = arith.mulf %201, %200 : vector<8x512xf32>
    %cst_71 = arith.constant 1.000000e+00 : f32
    %203 = vector.broadcast %cst_71 : f32 to vector<8x512xf32>
    %204 = arith.addf %203, %202 : vector<8x512xf32>
    %cst_72 = arith.constant 1.000000e+00 : f32
    %205 = vector.broadcast %cst_72 : f32 to vector<8x512xf32>
    %206 = arith.divf %205, %204 : vector<8x512xf32>
    %cst_73 = arith.constant 1.06140542 : f32
    %207 = vector.broadcast %cst_73 : f32 to vector<8x512xf32>
    %208 = arith.mulf %207, %206 : vector<8x512xf32>
    %cst_74 = arith.constant 1.45315206 : f32
    %209 = vector.broadcast %cst_74 : f32 to vector<8x512xf32>
    %210 = arith.subf %208, %209 : vector<8x512xf32>
    %211 = arith.mulf %210, %206 : vector<8x512xf32>
    %cst_75 = arith.constant 1.42141378 : f32
    %212 = vector.broadcast %cst_75 : f32 to vector<8x512xf32>
    %213 = arith.addf %211, %212 : vector<8x512xf32>
    %214 = arith.mulf %213, %206 : vector<8x512xf32>
    %cst_76 = arith.constant 0.284496725 : f32
    %215 = vector.broadcast %cst_76 : f32 to vector<8x512xf32>
    %216 = arith.subf %214, %215 : vector<8x512xf32>
    %217 = arith.mulf %216, %206 : vector<8x512xf32>
    %cst_77 = arith.constant 0.254829586 : f32
    %218 = vector.broadcast %cst_77 : f32 to vector<8x512xf32>
    %219 = arith.addf %217, %218 : vector<8x512xf32>
    %220 = arith.mulf %219, %206 : vector<8x512xf32>
    %cst_78 = arith.constant 0.000000e+00 : f32
    %221 = vector.broadcast %cst_78 : f32 to vector<8x512xf32>
    %222 = arith.subf %221, %200 : vector<8x512xf32>
    %223 = arith.mulf %222, %200 : vector<8x512xf32>
    %224 = math.exp %223 : vector<8x512xf32>
    %225 = arith.mulf %220, %224 : vector<8x512xf32>
    %cst_79 = arith.constant 1.000000e+00 : f32
    %226 = vector.broadcast %cst_79 : f32 to vector<8x512xf32>
    %227 = arith.subf %226, %225 : vector<8x512xf32>
    %cst_80 = arith.constant 0.000000e+00 : f32
    %228 = vector.broadcast %cst_80 : f32 to vector<8x512xf32>
    %229 = arith.cmpf oge, %199, %228 : vector<8x512xf32>
    %cst_81 = arith.constant 0.000000e+00 : f32
    %230 = vector.broadcast %cst_81 : f32 to vector<8x512xf32>
    %231 = arith.subf %230, %227 : vector<8x512xf32>
    %232 = arith.select %229, %227, %231 : vector<8x512xi1>, vector<8x512xf32>
    %cst_82 = arith.constant 5.000000e-01 : f32
    %233 = vector.broadcast %cst_82 : f32 to vector<8x512xf32>
    %234 = arith.mulf %233, %197 : vector<8x512xf32>
    %cst_83 = arith.constant 1.000000e+00 : f32
    %235 = vector.broadcast %cst_83 : f32 to vector<8x512xf32>
    %236 = arith.addf %235, %232 : vector<8x512xf32>
    %237 = arith.mulf %234, %236 : vector<8x512xf32>
    %238 = arith.truncf %237 : vector<8x512xf32> to vector<8x512xbf16>
    %c0_84 = arith.constant 0 : index
    %c0_85 = arith.constant 0 : index
    %239 = vector.load %arg12[%c0_84, %c0_85] : memref<512x128xbf16, #tpu.memory_space<vmem>>, vector<512x128xbf16>
    %cst_86 = arith.constant dense<0.000000e+00> : vector<8x128xf32>
    %240 = tpu.matmul %238, %239, %cst_86 {dimension_numbers = #tpu.dot_dimension_numbers<[1], [0], [0], [1], [0, 0, 1, 1], [], []>} : vector<8x512xbf16>, vector<512x128xbf16>, vector<8x128xf32> -> vector<8x128xf32>
    %c0_87 = arith.constant 0 : index
    %c0_88 = arith.constant 0 : index
    %241 = vector.load %arg13[%c0_87, %c0_88] : memref<1x128xf32, #tpu.memory_space<vmem>>, vector<1x128xf32>
    %242 = vector.broadcast %241 : vector<1x128xf32> to vector<8x128xf32>
    %243 = arith.addf %240, %242 : vector<8x128xf32>
    %244 = arith.addf %169, %243 : vector<8x128xf32>
    %c0_89 = arith.constant 0 : index
    %c0_90 = arith.constant 0 : index
    %c0_91 = arith.constant 0 : index
    %245 = vector.load %arg17[%c0_89, %c0_90, %c0_91] : memref<1x8x128xf32, #tpu.memory_space<vmem>>, vector<1x8x128xf32>
    %246 = vector.shape_cast %245 : vector<1x8x128xf32> to vector<8x128xf32>
    %247 = vector.shape_cast %244 : vector<8x128xf32> to vector<1x8x128xf32>
    tpu.vector_store %arg17[%c0_89, %c0_90, %c0_91], %247 {strides = array<i32>} : memref<1x8x128xf32, #tpu.memory_space<vmem>>, vector<1x8x128xf32>,
    return
  }
  func.func @transform_0(%arg0: i32) -> (i32, i32, i32) {
    %c0_i32 = arith.constant 0 : i32
    %c0_i32_0 = arith.constant 0 : i32
    %c0_i32_1 = arith.constant 0 : i32
    return %arg0, %c0_i32, %c0_i32_0 : i32, i32, i32
  }
  func.func @transform_1(%arg0: i32) -> (i32, i32) {
    %c0_i32 = arith.constant 0 : i32
    %c0_i32_0 = arith.constant 0 : i32
    %c0_i32_1 = arith.constant 0 : i32
    return %c0_i32, %c0_i32_0 : i32, i32
  }
  func.func @transform_2(%arg0: i32) -> (i32, i32) {
    %c0_i32 = arith.constant 0 : i32
    %c0_i32_0 = arith.constant 0 : i32
    %c0_i32_1 = arith.constant 0 : i32
    return %c0_i32, %c0_i32_0 : i32, i32
  }
  func.func @transform_3(%arg0: i32) -> (i32, i32) {
    %c0_i32 = arith.constant 0 : i32
    %c0_i32_0 = arith.constant 0 : i32
    %c0_i32_1 = arith.constant 0 : i32
    return %c0_i32, %c0_i32_0 : i32, i32
  }
  func.func @transform_4(%arg0: i32) -> (i32, i32) {
    %c0_i32 = arith.constant 0 : i32
    %c0_i32_0 = arith.constant 0 : i32
    %c0_i32_1 = arith.constant 0 : i32
    return %c0_i32, %c0_i32_0 : i32, i32
  }
  func.func @transform_5(%arg0: i32) -> (i32, i32) {
    %c0_i32 = arith.constant 0 : i32
    %c0_i32_0 = arith.constant 0 : i32
    %c0_i32_1 = arith.constant 0 : i32
    return %c0_i32, %c0_i32_0 : i32, i32
  }
  func.func @transform_6(%arg0: i32) -> (i32, i32) {
    %c0_i32 = arith.constant 0 : i32
    %c0_i32_0 = arith.constant 0 : i32
    %c0_i32_1 = arith.constant 0 : i32
    return %c0_i32, %c0_i32_0 : i32, i32
  }
  func.func @transform_7(%arg0: i32) -> (i32, i32) {
    %c0_i32 = arith.constant 0 : i32
    %c0_i32_0 = arith.constant 0 : i32
    %c0_i32_1 = arith.constant 0 : i32
    return %c0_i32, %c0_i32_0 : i32, i32
  }
  func.func @transform_8(%arg0: i32) -> (i32, i32) {
    %c0_i32 = arith.constant 0 : i32
    %c0_i32_0 = arith.constant 0 : i32
    %c0_i32_1 = arith.constant 0 : i32
    return %c0_i32, %c0_i32_0 : i32, i32
  }
  func.func @transform_9(%arg0: i32) -> (i32, i32) {
    %c0_i32 = arith.constant 0 : i32
    %c0_i32_0 = arith.constant 0 : i32
    %c0_i32_1 = arith.constant 0 : i32
    return %c0_i32, %c0_i32_0 : i32, i32
  }
  func.func @transform_10(%arg0: i32) -> (i32, i32) {
    %c0_i32 = arith.constant 0 : i32
    %c0_i32_0 = arith.constant 0 : i32
    %c0_i32_1 = arith.constant 0 : i32
    return %c0_i32, %c0_i32_0 : i32, i32
  }
  func.func @transform_11(%arg0: i32) -> (i32, i32) {
    %c0_i32 = arith.constant 0 : i32
    %c0_i32_0 = arith.constant 0 : i32
    %c0_i32_1 = arith.constant 0 : i32
    return %c0_i32, %c0_i32_0 : i32, i32
  }
  func.func @transform_12(%arg0: i32) -> (i32, i32) {
    %c0_i32 = arith.constant 0 : i32
    %c0_i32_0 = arith.constant 0 : i32
    %c0_i32_1 = arith.constant 0 : i32
    return %c0_i32, %c0_i32_0 : i32, i32
  }
  func.func @transform_13(%arg0: i32) -> (i32, i32) {
    %c0_i32 = arith.constant 0 : i32
    %c0_i32_0 = arith.constant 0 : i32
    %c0_i32_1 = arith.constant 0 : i32
    return %c0_i32, %c0_i32_0 : i32, i32
  }
  func.func @transform_14(%arg0: i32) -> (i32, i32) {
    %c0_i32 = arith.constant 0 : i32
    %c0_i32_0 = arith.constant 0 : i32
    %c0_i32_1 = arith.constant 0 : i32
    return %c0_i32, %c0_i32_0 : i32, i32
  }
  func.func @transform_15(%arg0: i32) -> (i32, i32) {
    %c0_i32 = arith.constant 0 : i32
    %c0_i32_0 = arith.constant 0 : i32
    %c0_i32_1 = arith.constant 0 : i32
    return %c0_i32, %c0_i32_0 : i32, i32
  }
  func.func @transform_16(%arg0: i32) -> (i32, i32, i32) {
    %c0_i32 = arith.constant 0 : i32
    %c0_i32_0 = arith.constant 0 : i32
    %c0_i32_1 = arith.constant 0 : i32
    return %arg0, %c0_i32, %c0_i32_0 : i32, i32, i32
  }
}

</mosaic_0001>

<llo_original>
// kernel: tpu_custom_call.1
$region0: #{tpu_custom_call.1}
  #allocation0 [shape = 'u32[]', space=smem, size = 0x4, offset = 0x4, fixed_abs, tag = 'smem constant byte address 0x4 - core index']
  #allocation1 [shape = 'u32[72,128]{1,0:T(1,128)}', space=vmem, size = 0x9000, scoped, tag = 'internal scratch']
  %s0 = inlined_call_operand.hbm [shape: f32[2,8,128], index: 0, kind: input, shape index: {}]
  %s1 = inlined_call_operand.hbm [shape: f32[1,128], index: 1, kind: input, shape index: {}]
  %s2 = inlined_call_operand.hbm [shape: f32[1,128], index: 2, kind: input, shape index: {}]
  %s3 = inlined_call_operand.hbm [shape: bf16[128,384], index: 3, kind: input, shape index: {}]
  %s4 = inlined_call_operand.hbm [shape: f32[1,384], index: 4, kind: input, shape index: {}]
  %s5 = inlined_call_operand.hbm [shape: bf16[128,128], index: 5, kind: input, shape index: {}]
  %s6 = inlined_call_operand.hbm [shape: f32[1,128], index: 6, kind: input, shape index: {}]
  %s7 = inlined_call_operand.hbm [shape: f32[1,128], index: 7, kind: input, shape index: {}]
  %s8 = inlined_call_operand.hbm [shape: f32[1,128], index: 8, kind: input, shape index: {}]
  %s9 = inlined_call_operand.hbm [shape: bf16[128,512], index: 9, kind: input, shape index: {}]
  %s10 = inlined_call_operand.vmem [shape: f32[1,512], index: 10, kind: input, shape index: {}]
  %s11 = inlined_call_operand.hbm [shape: bf16[512,128], index: 11, kind: input, shape index: {}]
  %s12 = inlined_call_operand.hbm [shape: f32[1,128], index: 12, kind: input, shape index: {}]
  %s13 = inlined_call_operand.vmem [shape: f32[8,128], index: 13, kind: input, shape index: {}]
  %s14 = inlined_call_operand.hbm [shape: f32[8,128], index: 14, kind: input, shape index: {}]
  %s15 = inlined_call_operand.hbm [shape: f32[8,128], index: 15, kind: input, shape index: {}]
  %s16 = inlined_call_operand.hbm [shape: f32[2,8,128], index: 16, kind: output, shape index: {}]
  %s17 = sld [smem:[#allocation0]]
  $region153: #{tpu_custom_call.1} parent=0
    _
  %s19 = ssub.s32 1, %s17
  %s20 = scalar_select 0, %s19, %s17
  $region1: #{tpu_custom_call.1} parent=0
    #allocation2 [shape = 'u8[8192]{0}', space=vmem, size = 0x2000, scoped, tag = 'input window, operand 0']
    #allocation3 [shape = 's32[2]{0}', space=sflag, size = 0x8, scoped, tag = 'scoped memory for tpu_custom_call.1']
    #allocation4 [shape = 's32[2]{0}', space=sflag, size = 0x8, scoped, tag = 'scoped memory for tpu_custom_call.1']
    #allocation5 [shape = 'u8[512]{0}', space=vmem, size = 0x400, scoped, tag = 'input window, operand 1, single buffered']
    #allocation6 [shape = 's32[1]{0}', space=sflag, size = 0x4, scoped, tag = 'scoped memory for tpu_custom_call.1']
    #allocation7 [shape = 'u8[512]{0}', space=vmem, size = 0x400, scoped, tag = 'input window, operand 2, single buffered']
    #allocation8 [shape = 'u8[98304]{0}', space=vmem, size = 0x18000, scoped, tag = 'input window, operand 3, single buffered']
    #allocation9 [shape = 's32[1]{0}', space=sflag, size = 0x4, scoped, tag = 'scoped memory for tpu_custom_call.1']
    #allocation10 [shape = 'u8[1536]{0}', space=vmem, size = 0x800, scoped, tag = 'input window, operand 4, single buffered']
    #allocation11 [shape = 'u8[32768]{0}', space=vmem, size = 0x8000, scoped, tag = 'input window, operand 5, single buffered']
    #allocation12 [shape = 's32[1]{0}', space=sflag, size = 0x4, scoped, tag = 'scoped memory for tpu_custom_call.1']
    #allocation13 [shape = 'u8[512]{0}', space=vmem, size = 0x400, scoped, tag = 'input window, operand 6, single buffered']
    #allocation14 [shape = 'u8[512]{0}', space=vmem, size = 0x400, scoped, tag = 'input window, operand 7, single buffered']
    #allocation15 [shape = 's32[1]{0}', space=sflag, size = 0x4, scoped, tag = 'scoped memory for tpu_custom_call.1']
    #allocation16 [shape = 'u8[512]{0}', space=vmem, size = 0x400, scoped, tag = 'input window, operand 8, single buffered']
    #allocation17 [shape = 'u8[131072]{0}', space=vmem, size = 0x20000, scoped, tag = 'input window, operand 9, single buffered']
    #allocation18 [shape = 's32[1]{0}', space=sflag, size = 0x4, scoped, tag = 'scoped memory for tpu_custom_call.1']
    #allocation19 [shape = 'u8[131072]{0}', space=vmem, size = 0x20000, scoped, tag = 'input window, operand 11, single buffered']
    #allocation20 [shape = 'u8[512]{0}', space=vmem, size = 0x400, scoped, tag = 'input window, operand 12, single buffered']
    #allocation21 [shape = 's32[1]{0}', space=sflag, size = 0x4, scoped, tag = 'scoped memory for tpu_custom_call.1']
    #allocation22 [shape = 'u8[4096]{0}', space=vmem, size = 0x1000, scoped, tag = 'input window, operand 14, single buffered']
    #allocation23 [shape = 'u8[4096]{0}', space=vmem, size = 0x1000, scoped, tag = 'input window, operand 15, single buffered']
    #allocation24 [shape = 's32[1]{0}', space=sflag, size = 0x4, scoped, tag = 'scoped memory for tpu_custom_call.1']
    #allocation25 [shape = 'u8[8192]{0}', space=vmem, size = 0x2000, scoped, tag = 'output window, operand 0']
    %21 = vsyncpa [#allocation3], 0
    %s22 = scalar_lea.sflag [#allocation3], 1
    %23 = vsyncpa %s22, 0
    %24 = vsyncpa [#allocation6], 0
    %25 = vsyncpa [#allocation9], 0
    %26 = vsyncpa [#allocation12], 0
    %27 = vsyncpa [#allocation15], 0
    %28 = vsyncpa [#allocation18], 0
    %29 = vsyncpa [#allocation21], 0
    %30 = vsyncpa [#allocation24], 0
    %31 = vsyncpa [#allocation4], 0
    %s32 = scalar_lea.sflag [#allocation4], 1
    %33 = vsyncpa %s32, 0
    loop: start=0, step=1, limit=4
    $region2: #{tpu_custom_call.1} parent=1 // loop_pre_header
      _
    $region3: #{tpu_custom_call.1} parent=1 // loop_header
      %s35 = sphi 0, %s39
      %p36 = scmp.ge.s32.totalorder %s35, 4
      %s45 = sphi 0, %s47
      %s48 = sphi 0, %s45
      %s49 = sphi 0, %s48
      %s65 = sphi 0, %s49
      %s69 = sphi 0, %s69
      %s71 = sphi 0, %s69
      %s72 = sphi 0, %s71
      %s86 = sphi 0, %s72
      %s90 = sphi 0, %s90
      %s92 = sphi 0, %s90
      %s93 = sphi 0, %s92
      %s107 = sphi 0, %s93
      %s111 = sphi 0, %s111
      %s113 = sphi 0, %s111
      %s114 = sphi 0, %s113
      %s128 = sphi 0, %s114
      %s132 = sphi 0, %s132
      %s134 = sphi 0, %s132
      %s135 = sphi 0, %s134
      %s149 = sphi 0, %s135
      %s153 = sphi 0, %s153
      %s155 = sphi 0, %s153
      %s156 = sphi 0, %s155
      %s170 = sphi 0, %s156
      %s174 = sphi 0, %s174
      %s176 = sphi 0, %s174
      %s177 = sphi 0, %s176
      %s191 = sphi 0, %s177
      %s195 = sphi 0, %s195
      %s197 = sphi 0, %s195
      %s198 = sphi 0, %s197
      %s212 = sphi 0, %s198
      %s216 = sphi 0, %s216
      %s218 = sphi 0, %s216
      %s219 = sphi 0, %s218
      %s233 = sphi 0, %s219
      %s237 = sphi 0, %s237
      %s239 = sphi 0, %s237
      %s240 = sphi 0, %s239
      %s254 = sphi 0, %s240
      %s258 = sphi 0, %s258
      %s260 = sphi 0, %s258
      %s261 = sphi 0, %s260
      %s275 = sphi 0, %s261
      %s279 = sphi 0, %s279
      %s281 = sphi 0, %s279
      %s282 = sphi 0, %s281
      %s296 = sphi 0, %s282
      %s300 = sphi 0, %s300
      %s302 = sphi 0, %s300
      %s303 = sphi 0, %s302
      %s317 = sphi 0, %s303
      %s321 = sphi 0, %s321
      %s323 = sphi 0, %s321
      %s324 = sphi 0, %s323
      %s338 = sphi 0, %s324
      %s342 = sphi 0, %s342
      %s344 = sphi 0, %s342
      %s345 = sphi 0, %s344
      %s359 = sphi 0, %s345
      %s363 = sphi 0, %s363
      %s365 = sphi 0, %s363
      %s366 = sphi 0, %s365
      %s380 = sphi 0, %s366
      %s386 = sphi 0, %s388
      %s389 = sphi 0, %s386
      %s390 = sphi 0, %s389
      %s406 = sphi 0, %s390
    $region4: #{tpu_custom_call.1} parent=1 // loop_header_branch
      %38 = sbr.rel (%p36) target = $region8
    $region5: #{tpu_custom_call.1} parent=1 // loop_body
      %s40 = ssub.s32 %s35, 1
      %s41 = ssub.s32 %s35, 2
      %s42 = sadd.s32 %s35, 1
      %s43 = ssub.s32 %s35, %s42
      %p44 = scmp.eq.s32.totalorder %s43, 0
      %s46 = sadd.s32 %s45, 1
      %s47 = scalar_select %p44, %s45, %s46
      %p50 = pneg %p44
      %p51 = scmp.eq.s32.totalorder %s35, 1
      %p52 = por %p50, %p51
      %p53 = scmp.ne.s32.totalorder %s45, %s48
      %p54 = scmp.eq.s32.totalorder %s35, 0
      %p55 = por %p53, %p54
      %p56 = scmp.ne.s32.totalorder %s45, %s48
      %p57 = scmp.eq.s32.totalorder %s40, 1
      %p58 = por %p56, %p57
      %p59 = scmp.ne.s32.totalorder %s48, %s49
      %p60 = scmp.eq.s32.totalorder %s40, 0
      %p61 = por %p59, %p60
      %p62 = scmp.ne.s32.totalorder %s48, %s49
      %p63 = scmp.eq.s32.totalorder %s41, 1
      %p64 = por %p62, %p63
      %p66 = scmp.ne.s32.totalorder %s49, %s65
      %p67 = scmp.eq.s32.totalorder %s41, 0
      %p68 = por %p66, %p67
      %s70 = sadd.s32 %s69, 1
      %p73 = scmp.eq.s32.totalorder %s35, 1
      %p74 = scmp.ne.s32.totalorder %s69, %s71
      %p75 = scmp.eq.s32.totalorder %s35, 0
      %p76 = por %p74, %p75
      %p77 = scmp.ne.s32.totalorder %s69, %s71
      %p78 = scmp.eq.s32.totalorder %s40, 1
      %p79 = por %p77, %p78
      %p80 = scmp.ne.s32.totalorder %s71, %s72
      %p81 = scmp.eq.s32.totalorder %s40, 0
      %p82 = por %p80, %p81
      %p83 = scmp.ne.s32.totalorder %s71, %s72
      %p84 = scmp.eq.s32.totalorder %s41, 1
      %p85 = por %p83, %p84
      %p87 = scmp.ne.s32.totalorder %s72, %s86
      %p88 = scmp.eq.s32.totalorder %s41, 0
      %p89 = por %p87, %p88
      %s91 = sadd.s32 %s90, 1
      %p94 = scmp.eq.s32.totalorder %s35, 1
      %p95 = scmp.ne.s32.totalorder %s90, %s92
      %p96 = scmp.eq.s32.totalorder %s35, 0
      %p97 = por %p95, %p96
      %p98 = scmp.ne.s32.totalorder %s90, %s92
      %p99 = scmp.eq.s32.totalorder %s40, 1
      %p100 = por %p98, %p99
      %p101 = scmp.ne.s32.totalorder %s92, %s93
      %p102 = scmp.eq.s32.totalorder %s40, 0
      %p103 = por %p101, %p102
      %p104 = scmp.ne.s32.totalorder %s92, %s93
      %p105 = scmp.eq.s32.totalorder %s41, 1
      %p106 = por %p104, %p105
      %p108 = scmp.ne.s32.totalorder %s93, %s107
      %p109 = scmp.eq.s32.totalorder %s41, 0
      %p110 = por %p108, %p109
      %s112 = sadd.s32 %s111, 1
      %p115 = scmp.eq.s32.totalorder %s35, 1
      %p116 = scmp.ne.s32.totalorder %s111, %s113
      %p117 = scmp.eq.s32.totalorder %s35, 0
      %p118 = por %p116, %p117
      %p119 = scmp.ne.s32.totalorder %s111, %s113
      %p120 = scmp.eq.s32.totalorder %s40, 1
      %p121 = por %p119, %p120
      %p122 = scmp.ne.s32.totalorder %s113, %s114
      %p123 = scmp.eq.s32.totalorder %s40, 0
      %p124 = por %p122, %p123
      %p125 = scmp.ne.s32.totalorder %s113, %s114
      %p126 = scmp.eq.s32.totalorder %s41, 1
      %p127 = por %p125, %p126
      %p129 = scmp.ne.s32.totalorder %s114, %s128
      %p130 = scmp.eq.s32.totalorder %s41, 0
      %p131 = por %p129, %p130
      %s133 = sadd.s32 %s132, 1
      %p136 = scmp.eq.s32.totalorder %s35, 1
      %p137 = scmp.ne.s32.totalorder %s132, %s134
      %p138 = scmp.eq.s32.totalorder %s35, 0
      %p139 = por %p137, %p138
      %p140 = scmp.ne.s32.totalorder %s132, %s134
      %p141 = scmp.eq.s32.totalorder %s40, 1
      %p142 = por %p140, %p141
      %p143 = scmp.ne.s32.totalorder %s134, %s135
      %p144 = scmp.eq.s32.totalorder %s40, 0
      %p145 = por %p143, %p144
      %p146 = scmp.ne.s32.totalorder %s134, %s135
      %p147 = scmp.eq.s32.totalorder %s41, 1
      %p148 = por %p146, %p147
      %p150 = scmp.ne.s32.totalorder %s135, %s149
      %p151 = scmp.eq.s32.totalorder %s41, 0
      %p152 = por %p150, %p151
      %s154 = sadd.s32 %s153, 1
      %p157 = scmp.eq.s32.totalorder %s35, 1
      %p158 = scmp.ne.s32.totalorder %s153, %s155
      %p159 = scmp.eq.s32.totalorder %s35, 0
      %p160 = por %p158, %p159
      %p161 = scmp.ne.s32.totalorder %s153, %s155
      %p162 = scmp.eq.s32.totalorder %s40, 1
      %p163 = por %p161, %p162
      %p164 = scmp.ne.s32.totalorder %s155, %s156
      %p165 = scmp.eq.s32.totalorder %s40, 0
      %p166 = por %p164, %p165
      %p167 = scmp.ne.s32.totalorder %s155, %s156
      %p168 = scmp.eq.s32.totalorder %s41, 1
      %p169 = por %p167, %p168
      %p171 = scmp.ne.s32.totalorder %s156, %s170
      %p172 = scmp.eq.s32.totalorder %s41, 0
      %p173 = por %p171, %p172
      %s175 = sadd.s32 %s174, 1
      %p178 = scmp.eq.s32.totalorder %s35, 1
      %p179 = scmp.ne.s32.totalorder %s174, %s176
      %p180 = scmp.eq.s32.totalorder %s35, 0
      %p181 = por %p179, %p180
      %p182 = scmp.ne.s32.totalorder %s174, %s176
      %p183 = scmp.eq.s32.totalorder %s40, 1
      %p184 = por %p182, %p183
      %p185 = scmp.ne.s32.totalorder %s176, %s177
      %p186 = scmp.eq.s32.totalorder %s40, 0
      %p187 = por %p185, %p186
      %p188 = scmp.ne.s32.totalorder %s176, %s177
      %p189 = scmp.eq.s32.totalorder %s41, 1
      %p190 = por %p188, %p189
      %p192 = scmp.ne.s32.totalorder %s177, %s191
      %p193 = scmp.eq.s32.totalorder %s41, 0
      %p194 = por %p192, %p193
      %s196 = sadd.s32 %s195, 1
      %p199 = scmp.eq.s32.totalorder %s35, 1
      %p200 = scmp.ne.s32.totalorder %s195, %s197
      %p201 = scmp.eq.s32.totalorder %s35, 0
      %p202 = por %p200, %p201
      %p203 = scmp.ne.s32.totalorder %s195, %s197
      %p204 = scmp.eq.s32.totalorder %s40, 1
      %p205 = por %p203, %p204
      %p206 = scmp.ne.s32.totalorder %s197, %s198
      %p207 = scmp.eq.s32.totalorder %s40, 0
      %p208 = por %p206, %p207
      %p209 = scmp.ne.s32.totalorder %s197, %s198
      %p210 = scmp.eq.s32.totalorder %s41, 1
      %p211 = por %p209, %p210
      %p213 = scmp.ne.s32.totalorder %s198, %s212
      %p214 = scmp.eq.s32.totalorder %s41, 0
      %p215 = por %p213, %p214
      %s217 = sadd.s32 %s216, 1
      %p220 = scmp.eq.s32.totalorder %s35, 1
      %p221 = scmp.ne.s32.totalorder %s216, %s218
      %p222 = scmp.eq.s32.totalorder %s35, 0
      %p223 = por %p221, %p222
      %p224 = scmp.ne.s32.totalorder %s216, %s218
      %p225 = scmp.eq.s32.totalorder %s40, 1
      %p226 = por %p224, %p225
      %p227 = scmp.ne.s32.totalorder %s218, %s219
      %p228 = scmp.eq.s32.totalorder %s40, 0
      %p229 = por %p227, %p228
      %p230 = scmp.ne.s32.totalorder %s218, %s219
      %p231 = scmp.eq.s32.totalorder %s41, 1
      %p232 = por %p230, %p231
      %p234 = scmp.ne.s32.totalorder %s219, %s233
      %p235 = scmp.eq.s32.totalorder %s41, 0
      %p236 = por %p234, %p235
      %s238 = sadd.s32 %s237, 1
      %p241 = scmp.eq.s32.totalorder %s35, 1
      %p242 = scmp.ne.s32.totalorder %s237, %s239
      %p243 = scmp.eq.s32.totalorder %s35, 0
      %p244 = por %p242, %p243
      %p245 = scmp.ne.s32.totalorder %s237, %s239
      %p246 = scmp.eq.s32.totalorder %s40, 1
      %p247 = por %p245, %p246
      %p248 = scmp.ne.s32.totalorder %s239, %s240
      %p249 = scmp.eq.s32.totalorder %s40, 0
      %p250 = por %p248, %p249
      %p251 = scmp.ne.s32.totalorder %s239, %s240
      %p252 = scmp.eq.s32.totalorder %s41, 1
      %p253 = por %p251, %p252
      %p255 = scmp.ne.s32.totalorder %s240, %s254
      %p256 = scmp.eq.s32.totalorder %s41, 0
      %p257 = por %p255, %p256
      %s259 = sadd.s32 %s258, 1
      %p262 = scmp.eq.s32.totalorder %s35, 1
      %p263 = scmp.ne.s32.totalorder %s258, %s260
      %p264 = scmp.eq.s32.totalorder %s35, 0
      %p265 = por %p263, %p264
      %p266 = scmp.ne.s32.totalorder %s258, %s260
      %p267 = scmp.eq.s32.totalorder %s40, 1
      %p268 = por %p266, %p267
      %p269 = scmp.ne.s32.totalorder %s260, %s261
      %p270 = scmp.eq.s32.totalorder %s40, 0
      %p271 = por %p269, %p270
      %p272 = scmp.ne.s32.totalorder %s260, %s261
      %p273 = scmp.eq.s32.totalorder %s41, 1
      %p274 = por %p272, %p273
      %p276 = scmp.ne.s32.totalorder %s261, %s275
      %p277 = scmp.eq.s32.totalorder %s41, 0
      %p278 = por %p276, %p277
      %s280 = sadd.s32 %s279, 1
      %p283 = scmp.eq.s32.totalorder %s35, 1
      %p284 = scmp.ne.s32.totalorder %s279, %s281
      %p285 = scmp.eq.s32.totalorder %s35, 0
      %p286 = por %p284, %p285
      %p287 = scmp.ne.s32.totalorder %s279, %s281
      %p288 = scmp.eq.s32.totalorder %s40, 1
      %p289 = por %p287, %p288
      %p290 = scmp.ne.s32.totalorder %s281, %s282
      %p291 = scmp.eq.s32.totalorder %s40, 0
      %p292 = por %p290, %p291
      %p293 = scmp.ne.s32.totalorder %s281, %s282
      %p294 = scmp.eq.s32.totalorder %s41, 1
      %p295 = por %p293, %p294
      %p297 = scmp.ne.s32.totalorder %s282, %s296
      %p298 = scmp.eq.s32.totalorder %s41, 0
      %p299 = por %p297, %p298
      %s301 = sadd.s32 %s300, 1
      %p304 = scmp.eq.s32.totalorder %s35, 1
      %p305 = scmp.ne.s32.totalorder %s300, %s302
      %p306 = scmp.eq.s32.totalorder %s35, 0
      %p307 = por %p305, %p306
      %p308 = scmp.ne.s32.totalorder %s300, %s302
      %p309 = scmp.eq.s32.totalorder %s40, 1
      %p310 = por %p308, %p309
      %p311 = scmp.ne.s32.totalorder %s302, %s303
      %p312 = scmp.eq.s32.totalorder %s40, 0
      %p313 = por %p311, %p312
      %p314 = scmp.ne.s32.totalorder %s302, %s303
      %p315 = scmp.eq.s32.totalorder %s41, 1
      %p316 = por %p314, %p315
      %p318 = scmp.ne.s32.totalorder %s303, %s317
      %p319 = scmp.eq.s32.totalorder %s41, 0
      %p320 = por %p318, %p319
      %s322 = sadd.s32 %s321, 1
      %p325 = scmp.eq.s32.totalorder %s35, 1
      %p326 = scmp.ne.s32.totalorder %s321, %s323
      %p327 = scmp.eq.s32.totalorder %s35, 0
      %p328 = por %p326, %p327
      %p329 = scmp.ne.s32.totalorder %s321, %s323
      %p330 = scmp.eq.s32.totalorder %s40, 1
      %p331 = por %p329, %p330
      %p332 = scmp.ne.s32.totalorder %s323, %s324
      %p333 = scmp.eq.s32.totalorder %s40, 0
      %p334 = por %p332, %p333
      %p335 = scmp.ne.s32.totalorder %s323, %s324
      %p336 = scmp.eq.s32.totalorder %s41, 1
      %p337 = por %p335, %p336
      %p339 = scmp.ne.s32.totalorder %s324, %s338
      %p340 = scmp.eq.s32.totalorder %s41, 0
      %p341 = por %p339, %p340
      %s343 = sadd.s32 %s342, 1
      %p346 = scmp.eq.s32.totalorder %s35, 1
      %p347 = scmp.ne.s32.totalorder %s342, %s344
      %p348 = scmp.eq.s32.totalorder %s35, 0
      %p349 = por %p347, %p348
      %p350 = scmp.ne.s32.totalorder %s342, %s344
      %p351 = scmp.eq.s32.totalorder %s40, 1
      %p352 = por %p350, %p351
      %p353 = scmp.ne.s32.totalorder %s344, %s345
      %p354 = scmp.eq.s32.totalorder %s40, 0
      %p355 = por %p353, %p354
      %p356 = scmp.ne.s32.totalorder %s344, %s345
      %p357 = scmp.eq.s32.totalorder %s41, 1
      %p358 = por %p356, %p357
      %p360 = scmp.ne.s32.totalorder %s345, %s359
      %p361 = scmp.eq.s32.totalorder %s41, 0
      %p362 = por %p360, %p361
      %s364 = sadd.s32 %s363, 1
      %p367 = scmp.eq.s32.totalorder %s35, 1
      %p368 = scmp.ne.s32.totalorder %s363, %s365
      %p369 = scmp.eq.s32.totalorder %s35, 0
      %p370 = por %p368, %p369
      %p371 = scmp.ne.s32.totalorder %s363, %s365
      %p372 = scmp.eq.s32.totalorder %s40, 1
      %p373 = por %p371, %p372
      %p374 = scmp.ne.s32.totalorder %s365, %s366
      %p375 = scmp.eq.s32.totalorder %s40, 0
      %p376 = por %p374, %p375
      %p377 = scmp.ne.s32.totalorder %s365, %s366
      %p378 = scmp.eq.s32.totalorder %s41, 1
      %p379 = por %p377, %p378
      %p381 = scmp.ne.s32.totalorder %s366, %s380
      %p382 = scmp.eq.s32.totalorder %s41, 0
      %p383 = por %p381, %p382
      %s384 = ssub.s32 %s35, %s42
      %p385 = scmp.eq.s32.totalorder %s384, 0
      %s387 = sadd.s32 %s386, 1
      %s388 = scalar_select %p385, %s386, %s387
      %p391 = pneg %p385
      %p392 = scmp.eq.s32.totalorder %s35, 1
      %p393 = por %p391, %p392
      %p394 = scmp.ne.s32.totalorder %s386, %s389
      %p395 = scmp.eq.s32.totalorder %s35, 0
      %p396 = por %p394, %p395
      %p397 = scmp.ne.s32.totalorder %s386, %s389
      %p398 = scmp.eq.s32.totalorder %s40, 1
      %p399 = por %p397, %p398
      %p400 = scmp.ne.s32.totalorder %s389, %s390
      %p401 = scmp.eq.s32.totalorder %s40, 0
      %p402 = por %p400, %p401
      %p403 = scmp.ne.s32.totalorder %s389, %s390
      %p404 = scmp.eq.s32.totalorder %s41, 1
      %p405 = por %p403, %p404
      %p407 = scmp.ne.s32.totalorder %s390, %s406
      %p408 = scmp.eq.s32.totalorder %s41, 0
      %p409 = por %p407, %p408
      %p410 = scmp.le.s32.totalorder 1, %s35
      %p411 = scmp.lt.s32.totalorder %s35, 3
      %p412 = pnand %p410, %p411
      %p413 = pneg %p412
      // Predicated region
      $region9: #{tpu_custom_call.1} parent=5 // pred_check
        _
      $region10: #{tpu_custom_call.1} parent=5 // pred_check_branch
        %415 = sbr.rel (%p412) target = $region12
      $region11: #{tpu_custom_call.1} parent=5 // pred_region
        %s416 = ssub.s32 %s35, 1
        // Predicated region
        $region13: #{tpu_custom_call.1} parent=11 // pred_check
          %p417 = pneg %p82
        $region14: #{tpu_custom_call.1} parent=11 // pred_check_branch
          %419 = sbr.rel (%p417) target = $region16
        $region15: #{tpu_custom_call.1} parent=11 // pred_region
          %421 = vsyncadd [#allocation6], 0
          %s423 = sshll.u32 %s1, 4
          %s424 = int_to_ptr.hbm [resolvable:$true] %s423
          %s425 = sshll.u32 [#allocation5], 4
          %s426 = int_to_ptr.vmem [resolvable:$true] %s425
          %428 = dma.hbm_to_vmem [thread:$0]  %s424, 16, %s426, [#allocation6]
        $region16: #{tpu_custom_call.1} parent=11 // pred_fallthru
          _
        // Predicated region
        $region17: #{tpu_custom_call.1} parent=11 // pred_check
          %p429 = pneg %p103
        $region18: #{tpu_custom_call.1} parent=11 // pred_check_branch
          %431 = sbr.rel (%p429) target = $region20
        $region19: #{tpu_custom_call.1} parent=11 // pred_region
          %433 = vsyncadd [#allocation6], 0
          %s435 = sshll.u32 %s2, 4
          %s436 = int_to_ptr.hbm [resolvable:$true] %s435
          %s437 = sshll.u32 [#allocation7], 4
          %s438 = int_to_ptr.vmem [resolvable:$true] %s437
          %440 = dma.hbm_to_vmem [thread:$0]  %s436, 16, %s438, [#allocation6]
        $region20: #{tpu_custom_call.1} parent=11 // pred_fallthru
          _
        // Predicated region
        $region21: #{tpu_custom_call.1} parent=11 // pred_check
          %p441 = pneg %p124
        $region22: #{tpu_custom_call.1} parent=11 // pred_check_branch
          %443 = sbr.rel (%p441) target = $region24
        $region23: #{tpu_custom_call.1} parent=11 // pred_region
          %445 = vsyncadd [#allocation9], 0
          %s446 = sshll.u32 %s3, 4
          %s447 = int_to_ptr.hbm [resolvable:$true] %s446
          %s448 = sshll.u32 [#allocation8], 4
          %s449 = int_to_ptr.vmem [resolvable:$true] %s448
          %454 = dma.hbm_to_vmem [thread:$0]  %s447, 3072, %s449, [#allocation9], 192, 192, 12
        $region24: #{tpu_custom_call.1} parent=11 // pred_fallthru
          _
        // Predicated region
        $region25: #{tpu_custom_call.1} parent=11 // pred_check
          %p455 = pneg %p145
        $region26: #{tpu_custom_call.1} parent=11 // pred_check_branch
          %457 = sbr.rel (%p455) target = $region28
        $region27: #{tpu_custom_call.1} parent=11 // pred_region
          %459 = vsyncadd [#allocation9], 0
          %s461 = sshll.u32 %s4, 4
          %s462 = int_to_ptr.hbm [resolvable:$true] %s461
          %s463 = sshll.u32 [#allocation10], 4
          %s464 = int_to_ptr.vmem [resolvable:$true] %s463
          %466 = dma.hbm_to_vmem [thread:$0]  %s462, 48, %s464, [#allocation9]
        $region28: #{tpu_custom_call.1} parent=11 // pred_fallthru
          _
        // Predicated region
        $region29: #{tpu_custom_call.1} parent=11 // pred_check
          %p467 = pneg %p166
        $region30: #{tpu_custom_call.1} parent=11 // pred_check_branch
          %469 = sbr.rel (%p467) target = $region32
        $region31: #{tpu_custom_call.1} parent=11 // pred_region
          %471 = vsyncadd [#allocation12], 0
          %s472 = sshll.u32 %s5, 4
          %s473 = int_to_ptr.hbm [resolvable:$true] %s472
          %s474 = sshll.u32 [#allocation11], 4
          %s475 = int_to_ptr.vmem [resolvable:$true] %s474
          %480 = dma.hbm_to_vmem [thread:$0]  %s473, 1024, %s475, [#allocation12], 64, 64, 4
        $region32: #{tpu_custom_call.1} parent=11 // pred_fallthru
          _
        // Predicated region
        $region33: #{tpu_custom_call.1} parent=11 // pred_check
          %p481 = pneg %p187
        $region34: #{tpu_custom_call.1} parent=11 // pred_check_branch
          %483 = sbr.rel (%p481) target = $region36
        $region35: #{tpu_custom_call.1} parent=11 // pred_region
          %485 = vsyncadd [#allocation12], 0
          %s487 = sshll.u32 %s6, 4
          %s488 = int_to_ptr.hbm [resolvable:$true] %s487
          %s489 = sshll.u32 [#allocation13], 4
          %s490 = int_to_ptr.vmem [resolvable:$true] %s489
          %492 = dma.hbm_to_vmem [thread:$0]  %s488, 16, %s490, [#allocation12]
        $region36: #{tpu_custom_call.1} parent=11 // pred_fallthru
          _
        // Predicated region
        $region37: #{tpu_custom_call.1} parent=11 // pred_check
          %p493 = pneg %p208
        $region38: #{tpu_custom_call.1} parent=11 // pred_check_branch
          %495 = sbr.rel (%p493) target = $region40
        $region39: #{tpu_custom_call.1} parent=11 // pred_region
          %497 = vsyncadd [#allocation15], 0
          %s499 = sshll.u32 %s7, 4
          %s500 = int_to_ptr.hbm [resolvable:$true] %s499
          %s501 = sshll.u32 [#allocation14], 4
          %s502 = int_to_ptr.vmem [resolvable:$true] %s501
          %504 = dma.hbm_to_vmem [thread:$0]  %s500, 16, %s502, [#allocation15]
        $region40: #{tpu_custom_call.1} parent=11 // pred_fallthru
          _
        // Predicated region
        $region41: #{tpu_custom_call.1} parent=11 // pred_check
          %p505 = pneg %p229
        $region42: #{tpu_custom_call.1} parent=11 // pred_check_branch
          %507 = sbr.rel (%p505) target = $region44
        $region43: #{tpu_custom_call.1} parent=11 // pred_region
          %509 = vsyncadd [#allocation15], 0
          %s511 = sshll.u32 %s8, 4
          %s512 = int_to_ptr.hbm [resolvable:$true] %s511
          %s513 = sshll.u32 [#allocation16], 4
          %s514 = int_to_ptr.vmem [resolvable:$true] %s513
          %516 = dma.hbm_to_vmem [thread:$0]  %s512, 16, %s514, [#allocation15]
        $region44: #{tpu_custom_call.1} parent=11 // pred_fallthru
          _
        // Predicated region
        $region45: #{tpu_custom_call.1} parent=11 // pred_check
          %p517 = pneg %p250
        $region46: #{tpu_custom_call.1} parent=11 // pred_check_branch
          %519 = sbr.rel (%p517) target = $region48
        $region47: #{tpu_custom_call.1} parent=11 // pred_region
          %521 = vsyncadd [#allocation18], 0
          %s522 = sshll.u32 %s9, 4
          %s523 = int_to_ptr.hbm [resolvable:$true] %s522
          %s524 = sshll.u32 [#allocation17], 4
          %s525 = int_to_ptr.vmem [resolvable:$true] %s524
          %530 = dma.hbm_to_vmem [thread:$0]  %s523, 4096, %s525, [#allocation18], 256, 256, 16
        $region48: #{tpu_custom_call.1} parent=11 // pred_fallthru
          _
        // Predicated region
        $region49: #{tpu_custom_call.1} parent=11 // pred_check
          %p531 = pneg %p271
        $region50: #{tpu_custom_call.1} parent=11 // pred_check_branch
          %533 = sbr.rel (%p531) target = $region52
        $region51: #{tpu_custom_call.1} parent=11 // pred_region
          _
        $region52: #{tpu_custom_call.1} parent=11 // pred_fallthru
          _
        // Predicated region
        $region53: #{tpu_custom_call.1} parent=11 // pred_check
          %p534 = pneg %p292
        $region54: #{tpu_custom_call.1} parent=11 // pred_check_branch
          %536 = sbr.rel (%p534) target = $region56
        $region55: #{tpu_custom_call.1} parent=11 // pred_region
          %538 = vsyncadd [#allocation18], 0
          %s539 = sshll.u32 %s11, 4
          %s540 = int_to_ptr.hbm [resolvable:$true] %s539
          %s541 = sshll.u32 [#allocation19], 4
          %s542 = int_to_ptr.vmem [resolvable:$true] %s541
          %547 = dma.hbm_to_vmem [thread:$0]  %s540, 4096, %s542, [#allocation18], 64, 64, 4
        $region56: #{tpu_custom_call.1} parent=11 // pred_fallthru
          _
        // Predicated region
        $region57: #{tpu_custom_call.1} parent=11 // pred_check
          %p548 = pneg %p313
        $region58: #{tpu_custom_call.1} parent=11 // pred_check_branch
          %550 = sbr.rel (%p548) target = $region60
        $region59: #{tpu_custom_call.1} parent=11 // pred_region
          %552 = vsyncadd [#allocation21], 0
          %s554 = sshll.u32 %s12, 4
          %s555 = int_to_ptr.hbm [resolvable:$true] %s554
          %s556 = sshll.u32 [#allocation20], 4
          %s557 = int_to_ptr.vmem [resolvable:$true] %s556
          %559 = dma.hbm_to_vmem [thread:$0]  %s555, 16, %s557, [#allocation21]
        $region60: #{tpu_custom_call.1} parent=11 // pred_fallthru
          _
        // Predicated region
        $region61: #{tpu_custom_call.1} parent=11 // pred_check
          %p560 = pneg %p334
        $region62: #{tpu_custom_call.1} parent=11 // pred_check_branch
          %562 = sbr.rel (%p560) target = $region64
        $region63: #{tpu_custom_call.1} parent=11 // pred_region
          _
        $region64: #{tpu_custom_call.1} parent=11 // pred_fallthru
          _
        // Predicated region
        $region65: #{tpu_custom_call.1} parent=11 // pred_check
          %p563 = pneg %p355
        $region66: #{tpu_custom_call.1} parent=11 // pred_check_branch
          %565 = sbr.rel (%p563) target = $region68
        $region67: #{tpu_custom_call.1} parent=11 // pred_region
          %567 = vsyncadd [#allocation21], 0
          %s569 = sshll.u32 %s14, 4
          %s570 = int_to_ptr.hbm [resolvable:$true] %s569
          %s571 = sshll.u32 [#allocation22], 4
          %s572 = int_to_ptr.vmem [resolvable:$true] %s571
          %574 = dma.hbm_to_vmem [thread:$0]  %s570, 128, %s572, [#allocation21]
        $region68: #{tpu_custom_call.1} parent=11 // pred_fallthru
          _
        // Predicated region
        $region69: #{tpu_custom_call.1} parent=11 // pred_check
          %p575 = pneg %p376
        $region70: #{tpu_custom_call.1} parent=11 // pred_check_branch
          %577 = sbr.rel (%p575) target = $region72
        $region71: #{tpu_custom_call.1} parent=11 // pred_region
          %579 = vsyncadd [#allocation24], 0
          %s581 = sshll.u32 %s15, 4
          %s582 = int_to_ptr.hbm [resolvable:$true] %s581
          %s583 = sshll.u32 [#allocation23], 4
          %s584 = int_to_ptr.vmem [resolvable:$true] %s583
          %586 = dma.hbm_to_vmem [thread:$0]  %s582, 128, %s584, [#allocation24]
        $region72: #{tpu_custom_call.1} parent=11 // pred_fallthru
          _
      $region12: #{tpu_custom_call.1} parent=5 // pred_fallthru
        _
      %p587 = scmp.lt.s32.totalorder %s35, 2
      // Predicated region
      $region73: #{tpu_custom_call.1} parent=5 // pred_check
        %p588 = pneg %p587
      $region74: #{tpu_custom_call.1} parent=5 // pred_check_branch
        %590 = sbr.rel (%p588) target = $region76
      $region75: #{tpu_custom_call.1} parent=5 // pred_region
        // Predicated region
        $region77: #{tpu_custom_call.1} parent=75 // pred_check
          %p591 = pneg %p55
        $region78: #{tpu_custom_call.1} parent=75 // pred_check_branch
          %593 = sbr.rel (%p591) target = $region80
        $region79: #{tpu_custom_call.1} parent=75 // pred_region
          %s594 = sand.u32 %s45, 1
          %s595 = scalar_lea.sflag [#allocation3], %s594
          %s596 = sand.u32 %s45, 1
          %s597 = smul.addr %s596, 8
          %s598 = scalar_lea.vmem [#allocation2], %s597
          %600 = vsyncadd %s595, 0
          %s601 = smul.addr %s35, 8
          %s602 = scalar_lea.hbm %s0, %s601
          %s604 = sshll.u32 %s602, 4
          %s605 = int_to_ptr.hbm [resolvable:$true] %s604
          %s606 = sshll.u32 %s598, 4
          %s607 = int_to_ptr.vmem [resolvable:$true] %s606
          %609 = dma.hbm_to_vmem [thread:$0]  %s605, 128, %s607, %s595
        $region80: #{tpu_custom_call.1} parent=75 // pred_fallthru
          _
      $region76: #{tpu_custom_call.1} parent=5 // pred_fallthru
        _
      %p610 = scmp.le.s32.totalorder 1, %s35
      %p611 = scmp.lt.s32.totalorder %s35, 3
      %p612 = pnand %p610, %p611
      %p613 = pneg %p612
      // Predicated region
      $region81: #{tpu_custom_call.1} parent=5 // pred_check
        _
      $region82: #{tpu_custom_call.1} parent=5 // pred_check_branch
        %615 = sbr.rel (%p612) target = $region84
      $region83: #{tpu_custom_call.1} parent=5 // pred_region
        %s616 = ssub.s32 %s35, 1
        %s617 = sand.u32 %s48, 1
        %s618 = scalar_lea.sflag [#allocation3], %s617
        %s619 = sand.u32 %s48, 1
        %s620 = smul.addr %s619, 8
        %s621 = scalar_lea.vmem [#allocation2], %s620
        // Predicated region
        $region85: #{tpu_custom_call.1} parent=83 // pred_check
          %p622 = pneg %p61
        $region86: #{tpu_custom_call.1} parent=83 // pred_check_branch
          %624 = sbr.rel (%p622) target = $region88
        $region87: #{tpu_custom_call.1} parent=83 // pred_region
          %626 = dma.done %s618, 128
        $region88: #{tpu_custom_call.1} parent=83 // pred_fallthru
          _
        // Predicated region
        $region89: #{tpu_custom_call.1} parent=83 // pred_check
          %p627 = pneg %p82
        $region90: #{tpu_custom_call.1} parent=83 // pred_check_branch
          %629 = sbr.rel (%p627) target = $region92
        $region91: #{tpu_custom_call.1} parent=83 // pred_region
          %631 = dma.done [#allocation6], 16
        $region92: #{tpu_custom_call.1} parent=83 // pred_fallthru
          _
        // Predicated region
        $region93: #{tpu_custom_call.1} parent=83 // pred_check
          %p632 = pneg %p103
        $region94: #{tpu_custom_call.1} parent=83 // pred_check_branch
          %634 = sbr.rel (%p632) target = $region96
        $region95: #{tpu_custom_call.1} parent=83 // pred_region
          %636 = dma.done [#allocation6], 16
        $region96: #{tpu_custom_call.1} parent=83 // pred_fallthru
          _
        // Predicated region
        $region97: #{tpu_custom_call.1} parent=83 // pred_check
          %p637 = pneg %p124
        $region98: #{tpu_custom_call.1} parent=83 // pred_check_branch
          %639 = sbr.rel (%p637) target = $region100
        $region99: #{tpu_custom_call.1} parent=83 // pred_region
          %641 = dma.done [#allocation9], 3072
        $region100: #{tpu_custom_call.1} parent=83 // pred_fallthru
          _
        // Predicated region
        $region101: #{tpu_custom_call.1} parent=83 // pred_check
          %p642 = pneg %p145
        $region102: #{tpu_custom_call.1} parent=83 // pred_check_branch
          %644 = sbr.rel (%p642) target = $region104
        $region103: #{tpu_custom_call.1} parent=83 // pred_region
          %646 = dma.done [#allocation9], 48
        $region104: #{tpu_custom_call.1} parent=83 // pred_fallthru
          _
        // Predicated region
        $region105: #{tpu_custom_call.1} parent=83 // pred_check
          %p647 = pneg %p166
        $region106: #{tpu_custom_call.1} parent=83 // pred_check_branch
          %649 = sbr.rel (%p647) target = $region108
        $region107: #{tpu_custom_call.1} parent=83 // pred_region
          %651 = dma.done [#allocation12], 1024
        $region108: #{tpu_custom_call.1} parent=83 // pred_fallthru
          _
        // Predicated region
        $region109: #{tpu_custom_call.1} parent=83 // pred_check
          %p652 = pneg %p187
        $region110: #{tpu_custom_call.1} parent=83 // pred_check_branch
          %654 = sbr.rel (%p652) target = $region112
        $region111: #{tpu_custom_call.1} parent=83 // pred_region
          %656 = dma.done [#allocation12], 16
        $region112: #{tpu_custom_call.1} parent=83 // pred_fallthru
          _
        // Predicated region
        $region113: #{tpu_custom_call.1} parent=83 // pred_check
          %p657 = pneg %p208
        $region114: #{tpu_custom_call.1} parent=83 // pred_check_branch
          %659 = sbr.rel (%p657) target = $region116
        $region115: #{tpu_custom_call.1} parent=83 // pred_region
          %661 = dma.done [#allocation15], 16
        $region116: #{tpu_custom_call.1} parent=83 // pred_fallthru
          _
        // Predicated region
        $region117: #{tpu_custom_call.1} parent=83 // pred_check
          %p662 = pneg %p229
        $region118: #{tpu_custom_call.1} parent=83 // pred_check_branch
          %664 = sbr.rel (%p662) target = $region120
        $region119: #{tpu_custom_call.1} parent=83 // pred_region
          %666 = dma.done [#allocation15], 16
        $region120: #{tpu_custom_call.1} parent=83 // pred_fallthru
          _
        // Predicated region
        $region121: #{tpu_custom_call.1} parent=83 // pred_check
          %p667 = pneg %p250
        $region122: #{tpu_custom_call.1} parent=83 // pred_check_branch
          %669 = sbr.rel (%p667) target = $region124
        $region123: #{tpu_custom_call.1} parent=83 // pred_region
          %671 = dma.done [#allocation18], 4096
        $region124: #{tpu_custom_call.1} parent=83 // pred_fallthru
          _
        // Predicated region
        $region125: #{tpu_custom_call.1} parent=83 // pred_check
          %p672 = pneg %p292
        $region126: #{tpu_custom_call.1} parent=83 // pred_check_branch
          %674 = sbr.rel (%p672) target = $region128
        $region127: #{tpu_custom_call.1} parent=83 // pred_region
          %676 = dma.done [#allocation18], 4096
        $region128: #{tpu_custom_call.1} parent=83 // pred_fallthru
          _
        // Predicated region
        $region129: #{tpu_custom_call.1} parent=83 // pred_check
          %p677 = pneg %p313
        $region130: #{tpu_custom_call.1} parent=83 // pred_check_branch
          %679 = sbr.rel (%p677) target = $region132
        $region131: #{tpu_custom_call.1} parent=83 // pred_region
          %681 = dma.done [#allocation21], 16
        $region132: #{tpu_custom_call.1} parent=83 // pred_fallthru
          _
        // Predicated region
        $region133: #{tpu_custom_call.1} parent=83 // pred_check
          %p682 = pneg %p355
        $region134: #{tpu_custom_call.1} parent=83 // pred_check_branch
          %684 = sbr.rel (%p682) target = $region136
        $region135: #{tpu_custom_call.1} parent=83 // pred_region
          %686 = dma.done [#allocation21], 128
        $region136: #{tpu_custom_call.1} parent=83 // pred_fallthru
          _
        // Predicated region
        $region137: #{tpu_custom_call.1} parent=83 // pred_check
          %p687 = pneg %p376
        $region138: #{tpu_custom_call.1} parent=83 // pred_check_branch
          %689 = sbr.rel (%p687) target = $region140
        $region139: #{tpu_custom_call.1} parent=83 // pred_region
          %691 = dma.done [#allocation24], 128
        $region140: #{tpu_custom_call.1} parent=83 // pred_fallthru
          _
        %s692 = sand.u32 %s48, 1
        %s693 = scalar_lea.sflag [#allocation3], %s692
        %s694 = sand.u32 %s48, 1
        %s695 = smul.addr %s694, 8
        %s696 = scalar_lea.vmem [#allocation2], %s695
        %p697 = pneg %p61
        %p698 = pneg %p58
        %p699 = pneg %p82
        %p700 = pneg %p79
        %p701 = pneg %p103
        %p702 = pneg %p100
        %p703 = pneg %p124
        %p704 = pneg %p121
        %p705 = pneg %p145
        %p706 = pneg %p142
        %p707 = pneg %p166
        %p708 = pneg %p163
        %p709 = pneg %p187
        %p710 = pneg %p184
        %p711 = pneg %p208
        %p712 = pneg %p205
        %p713 = pneg %p229
        %p714 = pneg %p226
        %p715 = pneg %p250
        %p716 = pneg %p247
        %p717 = pneg %p271
        %p718 = pneg %p268
        %p719 = pneg %p292
        %p720 = pneg %p289
        %p721 = pneg %p313
        %p722 = pneg %p310
        %p723 = pneg %p334
        %p724 = pneg %p331
        %p725 = pneg %p355
        %p726 = pneg %p352
        %p727 = pneg %p376
        %p728 = pneg %p373
        %p729 = pneg %p402
        %p730 = pneg %p399
        %s731 = sand.u32 %s389, 1
        %s732 = scalar_lea.sflag [#allocation4], %s731
        %s733 = sand.u32 %s389, 1
        %s734 = smul.addr %s733, 8
        %s735 = scalar_lea.vmem [#allocation25], %s734
        %v737 = vld [vmem:[%s621] sm:$0xff]
        %v738 = vld [vmem:[%s13] sm:$0xff]
        %v739 = vld [vmem:[#allocation22] sm:$0xff]
        %v740 = vld [vmem:[#allocation23] sm:$0xff]
        %v741 = vld [vmem:[#allocation5] sm:$0x1]
        %v742 = vld [vmem:[#allocation7] sm:$0x1]
        %743 = vadd.xlane.f32.xlu0 %v737
        %v744 = vpop.xlane.xlu0 %743
        %v745 = vrcp.pop 128.0
        %v746 = vmul.f32 128.0, %v745
        %v747 = vsub.f32 1.0, %v746
        %v748 = vmul.f32 %v745, %v747
        %v749 = vadd.f32 %v745, %v748
        %vm750 = vweird.f32 %v745
        %v751 = vsel %vm750, %v745, %v749
        %v752 = vmul.f32 %v744, %v751
        %v753 = vsub.f32 %v737, %v752
        %v754 = vmul.f32 %v753, %v753
        %755 = vadd.xlane.f32.xlu0 %v754
        %v756 = vpop.xlane.xlu0 %755
        %v757 = vmul.f32 %v756, %v751
        %v758 = vadd.f32 %v757, 1e-05
        %v759 = vrsqrt.pop %v758
        %v760 = vmul.f32 %v759, %v758
        %v761 = vmul.f32 %v760, %v759
        %v762 = vmul.f32 0.5, %v761
        %v763 = vsub.f32 1.5, %v762
        %v764 = vmul.f32 %v759, %v763
        %vm765 = vweird.f32 %v758
        %vm766 = vweird.f32 %v759
        %vm767 = vmor %vm765, %vm766
        %v768 = vsel %vm767, %v759, %v764
        %v769 = vmul.f32 %v753, %v768
        %v771 = vperm.slane %v741, 0
        %v773 = vmul.f32 %v769, %v771
        %v775 = vperm.slane %v742, 0
        %v777 = vadd.f32 %v773, %v775
        %v778 = vpack.c.bf16 %v777, %v777
        %v779 = vld [vmem:[#allocation8] sm:$0xff]
        %v780 = vld [vmem:[#allocation8 + $0x8] sm:$0xf]
        %v781 = vld [vmem:[#allocation8 + $0xc] sm:$0xff]
        %v782 = vld [vmem:[#allocation8 + $0x14] sm:$0xf]
        %v783 = vld [vmem:[#allocation8 + $0x18] sm:$0xff]
        %v784 = vld [vmem:[#allocation8 + $0x20] sm:$0xf]
        %v785 = vld [vmem:[#allocation8 + $0x24] sm:$0xff]
        %v786 = vld [vmem:[#allocation8 + $0x2c] sm:$0xf]
        %v787 = vld [vmem:[#allocation8 + $0x30] sm:$0xff]
        %v788 = vld [vmem:[#allocation8 + $0x38] sm:$0xf]
        %v789 = vld [vmem:[#allocation8 + $0x3c] sm:$0xff]
        %v790 = vld [vmem:[#allocation8 + $0x44] sm:$0xf]
        %v791 = vld [vmem:[#allocation8 + $0x48] sm:$0xff]
        %v792 = vld [vmem:[#allocation8 + $0x50] sm:$0xf]
        %v793 = vld [vmem:[#allocation8 + $0x54] sm:$0xff]
        %v794 = vld [vmem:[#allocation8 + $0x5c] sm:$0xf]
        %v795 = vld [vmem:[#allocation8 + $0x60] sm:$0xff]
        %v796 = vld [vmem:[#allocation8 + $0x68] sm:$0xf]
        %v797 = vld [vmem:[#allocation8 + $0x6c] sm:$0xff]
        %v798 = vld [vmem:[#allocation8 + $0x74] sm:$0xf]
        %v799 = vld [vmem:[#allocation8 + $0x78] sm:$0xff]
        %v800 = vld [vmem:[#allocation8 + $0x80] sm:$0xf]
        %v801 = vld [vmem:[#allocation8 + $0x84] sm:$0xff]
        %v802 = vld [vmem:[#allocation8 + $0x8c] sm:$0xf]
        %v803 = vld [vmem:[#allocation8 + $0x90] sm:$0xff]
        %v804 = vld [vmem:[#allocation8 + $0x98] sm:$0xf]
        %v805 = vld [vmem:[#allocation8 + $0x9c] sm:$0xff]
        %v806 = vld [vmem:[#allocation8 + $0xa4] sm:$0xf]
        %v807 = vld [vmem:[#allocation8 + $0xa8] sm:$0xff]
        %v808 = vld [vmem:[#allocation8 + $0xb0] sm:$0xf]
        %v809 = vld [vmem:[#allocation8 + $0xb4] sm:$0xff]
        %v810 = vld [vmem:[#allocation8 + $0xbc] sm:$0xf]
        %v811 = vld [vmem:[#allocation10] sm:$0x7]
        %v813 = vperm.slane %v811, 0
        %v814 = vperm.slane %v811, 1
        %v815 = vperm.slane %v811, 2
        %v851 = vunpack.c.l.b16 %v779
        %v852 = vunpack.c.h.b16 %v779
        %v853 = vunpack.c.l.b16 %v780
        %v854 = vunpack.c.l.b16 %v781
        %v855 = vunpack.c.h.b16 %v781
        %v856 = vunpack.c.l.b16 %v782
        %v857 = vunpack.c.l.b16 %v783
        %v858 = vunpack.c.h.b16 %v783
        %v859 = vunpack.c.l.b16 %v784
        %v860 = vunpack.c.l.b16 %v785
        %v861 = vunpack.c.h.b16 %v785
        %v862 = vunpack.c.l.b16 %v786
        %v863 = vunpack.c.l.b16 %v787
        %v864 = vunpack.c.h.b16 %v787
        %v865 = vunpack.c.l.b16 %v788
        %v866 = vunpack.c.l.b16 %v789
        %v867 = vunpack.c.h.b16 %v789
        %v868 = vunpack.c.l.b16 %v790
        %v869 = vunpack.c.l.b16 %v791
        %v870 = vunpack.c.h.b16 %v791
        %v871 = vunpack.c.l.b16 %v792
        %v872 = vunpack.c.l.b16 %v793
        %v873 = vunpack.c.h.b16 %v793
        %v874 = vunpack.c.l.b16 %v794
        %v875 = vunpack.c.l.b16 %v795
        %v876 = vunpack.c.h.b16 %v795
        %v877 = vunpack.c.l.b16 %v796
        %v878 = vunpack.c.l.b16 %v797
        %v879 = vunpack.c.h.b16 %v797
        %v880 = vunpack.c.l.b16 %v798
        %v881 = vunpack.c.l.b16 %v799
        %v882 = vunpack.c.h.b16 %v799
        %v883 = vunpack.c.l.b16 %v800
        %v884 = vunpack.c.l.b16 %v801
        %v885 = vunpack.c.h.b16 %v801
        %v886 = vunpack.c.l.b16 %v802
        %v887 = vunpack.c.l.b16 %v803
        %v888 = vunpack.c.h.b16 %v803
        %v889 = vunpack.c.l.b16 %v804
        %v890 = vunpack.c.l.b16 %v805
        %v891 = vunpack.c.h.b16 %v805
        %v892 = vunpack.c.l.b16 %v806
        %v893 = vunpack.c.l.b16 %v807
        %v894 = vunpack.c.h.b16 %v807
        %v895 = vunpack.c.l.b16 %v808
        %v896 = vunpack.c.l.b16 %v809
        %v897 = vunpack.c.h.b16 %v809
        %v898 = vunpack.c.l.b16 %v810
        %v899 = vpack.c.b16 %v854, %v851
        %v900 = vpack.c.b16 %v855, %v852
        %v901 = vpack.c.b16 %v856, %v853
        %v902 = vpack.c.b16 %v860, %v857
        %v903 = vpack.c.b16 %v861, %v858
        %v904 = vpack.c.b16 %v862, %v859
        %v905 = vpack.c.b16 %v866, %v863
        %v906 = vpack.c.b16 %v867, %v864
        %v907 = vpack.c.b16 %v868, %v865
        %v908 = vpack.c.b16 %v872, %v869
        %v909 = vpack.c.b16 %v873, %v870
        %v910 = vpack.c.b16 %v874, %v871
        %v911 = vpack.c.b16 %v878, %v875
        %v912 = vpack.c.b16 %v879, %v876
        %v913 = vpack.c.b16 %v880, %v877
        %v914 = vpack.c.b16 %v884, %v881
        %v915 = vpack.c.b16 %v885, %v882
        %v916 = vpack.c.b16 %v886, %v883
        %v917 = vpack.c.b16 %v890, %v887
        %v918 = vpack.c.b16 %v891, %v888
        %v919 = vpack.c.b16 %v892, %v889
        %v920 = vpack.c.b16 %v896, %v893
        %v921 = vpack.c.b16 %v897, %v894
        %v922 = vpack.c.b16 %v898, %v895
        %947 = vmatpush.bf16.msra.mxu0 %v920
        %948 = vmatpush.bf16.msra.mxu0 %v917
        %949 = vmatpush.bf16.msra.mxu0 %v914
        %950 = vmatpush.bf16.msra.mxu0 %v911
        %951 = vmatpush.bf16.msra.mxu0 %v908
        %952 = vmatpush.bf16.msra.mxu0 %v905
        %953 = vmatpush.bf16.msra.mxu0 %v902
        %954 = vmatpush.bf16.msra.mxu0 %v899
        %955 = vmatmul.bf16.gmra.mxu0 %v778
        %v956 = vpop.f32.mrf.mxu0
        %v957 = vadd.f32 %v813, %v956
        %v958 = vpop.f32.mrf.mxu0
        %959 = vdwg.mxu0
        %960 = vmatpush.bf16.msra.mxu0 %v921
        %961 = vmatpush.bf16.msra.mxu0 %v918
        %962 = vmatpush.bf16.msra.mxu0 %v915
        %963 = vmatpush.bf16.msra.mxu0 %v912
        %964 = vmatpush.bf16.msra.mxu0 %v909
        %965 = vmatpush.bf16.msra.mxu0 %v906
        %966 = vmatpush.bf16.msra.mxu0 %v903
        %967 = vmatpush.bf16.msra.mxu0 %v900
        %968 = vmatmul.bf16.gmra.mxu0 %v778
        %v969 = vpop.f32.mrf.mxu0
        %v970 = vadd.f32 %v814, %v969
        %v971 = vpop.f32.mrf.mxu0
        %972 = vdwg.mxu0
        %973 = vmatpush.bf16.msra.mxu0 %v922
        %974 = vmatpush.bf16.msra.mxu0 %v919
        %975 = vmatpush.bf16.msra.mxu0 %v916
        %976 = vmatpush.bf16.msra.mxu0 %v913
        %977 = vmatpush.bf16.msra.mxu0 %v910
        %978 = vmatpush.bf16.msra.mxu0 %v907
        %979 = vmatpush.bf16.msra.mxu0 %v904
        %980 = vmatpush.bf16.msra.mxu0 %v901
        %981 = vmatmul.bf16.gmra.mxu0 %v778
        %v982 = vpop.f32.mrf.mxu0
        %v983 = vadd.f32 %v815, %v982
        %v984 = vpop.f32.mrf.mxu0
        %985 = vdwg.mxu0
        %v986 = vmul.f32 %v957, 0.17677669
        %v987 = vpack.c.bf16 %v983, %v983
        %v988 = vmul.f32 %v986, %v738
        %990 = vrot.lane.b32.xlu0 %v986, 112
        %v991 = vpop.permute.xlu0 %990
        %v993 = vmul.f32 %v991, %v739
        %v994 = vadd.f32 %v988, %v993
        %995 = vrot.lane.b32.xlu0 %v986, 16
        %v996 = vpop.permute.xlu0 %995
        %v998 = vmul.f32 %v996, %v740
        %v999 = vadd.f32 %v994, %v998
        %v1000 = vpack.c.bf16 %v999, %v999
        %v1001 = vmul.f32 %v970, %v738
        %1003 = vrot.lane.b32.xlu0 %v970, 112
        %v1004 = vpop.permute.xlu0 %1003
        %v1006 = vmul.f32 %v1004, %v739
        %v1007 = vadd.f32 %v1001, %v1006
        %1008 = vrot.lane.b32.xlu0 %v970, 16
        %v1009 = vpop.permute.xlu0 %1008
        %v1011 = vmul.f32 %v1009, %v740
        %v1012 = vadd.f32 %v1007, %v1011
        %v1013 = vpack.c.bf16 %v1012, %v1012
        %v1014 = vlaneseq
        %v1015 = vshrl.u32 %v1014, 7
        %v1016 = vlaneseq
        %v1017 = vand.u32 %v1016, 127
        %vm1018 = vcmp.ge.s32.totalorder %v1015, %v1017
        %vm1019 = vcmask 261120
        %v1021 = vsel %vm1019, %v1000, 0
        %v1024 = vsel %vm1019, %v1013, 0
        %1026 = vmatpush.bf16.xpose.msra.mxu0 0
        %1027 = vmatpush.bf16.xpose.msra.mxu0 0
        %1028 = vmatpush.bf16.xpose.msra.mxu0 0
        %1029 = vmatpush.bf16.xpose.msra.mxu0 0
        %1030 = vmatpush.bf16.xpose.msra.mxu0 0
        %1031 = vmatpush.bf16.xpose.msra.mxu0 0
        %1032 = vmatpush.bf16.xpose.msra.mxu0 0
        %1033 = vmatpush.bf16.xpose.msra.mxu0 %v1024
        %1034 = vmatmul.bf16.gmra.mxu0 %v1021
        %v1035 = vpop.f32.mrf.mxu0
        %v1036 = vadd.f32 0.0, %v1035
        %v1037 = vpop.f32.mrf.mxu0
        %1038 = vdwg.mxu0
        %v1039 = vsel %vm1018, %v1036, -1e+30
        %vm1040 = vcmask 64512
        %v1041 = vsel %vm1040, %v1039, -inf
        %1042 = vmax.xlane.f32.xlu0 %v1041
        %v1043 = vpop.xlane.xlu0 %1042
        %v1044 = vmax.f32 %v1043, 0.0
        %v1045 = vsub.f32 %v1039, %v1044
        %v1046 = vmul.f32 %v1045, 1.442695
        %v1047 = vpow.pop %v1046
        %v1048 = vsel %vm1040, %v1047, 0.0
        %1049 = vadd.xlane.f32.xlu0 %v1048
        %v1050 = vpop.xlane.xlu0 %1049
        %v1051 = vsub.f32 0.0, %v1044
        %v1052 = vmul.f32 %v1051, 1.442695
        %v1053 = vpow.pop %v1052
        %v1054 = vadd.f32 %v1050, %v1053
        %v1055 = vrcp.pop %v1054
        %v1056 = vmul.f32 %v1047, %v1055
        %v1057 = vpack.c.bf16 %v1056, %v1056
        %v1059 = vsel %vm1040, %v1057, 0
        %vm1061 = vcmask 1043456
        %v1063 = vsel %vm1061, %v987, 0
        %1065 = vmatpush.bf16.msra.mxu0 0
        %1066 = vmatpush.bf16.msra.mxu0 0
        %1067 = vmatpush.bf16.msra.mxu0 0
        %1068 = vmatpush.bf16.msra.mxu0 0
        %1069 = vmatpush.bf16.msra.mxu0 0
        %1070 = vmatpush.bf16.msra.mxu0 0
        %1071 = vmatpush.bf16.msra.mxu0 0
        %1072 = vmatpush.bf16.msra.mxu0 %v1063
        %1073 = vmatmul.bf16.gmra.mxu0 %v1059
        %v1074 = vpop.f32.mrf.mxu0
        %v1075 = vadd.f32 0.0, %v1074
        %v1076 = vpop.f32.mrf.mxu0
        %1077 = vdwg.mxu0
        %v1079 = vunpack.c.l.b16 %v1000
        %v1080 = vpack.c.b16 %v1079, %v1079
        %1081 = vrot.lane.b32.xlu0 %v1080, 96
        %v1082 = vpop.permute.xlu0 %1081
        %v1084 = vunpack.c.l.b16 %v1013
        %v1085 = vpack.c.b16 %v1084, %v1084
        %1086 = vrot.lane.b32.xlu0 %v1085, 96
        %v1087 = vpop.permute.xlu0 %1086
        %v1089 = vsel %vm1019, %v1082, 0
        %v1092 = vsel %vm1019, %v1087, 0
        %1094 = vmatpush.bf16.xpose.msra.mxu0 0
        %1095 = vmatpush.bf16.xpose.msra.mxu0 0
        %1096 = vmatpush.bf16.xpose.msra.mxu0 0
        %1097 = vmatpush.bf16.xpose.msra.mxu0 0
        %1098 = vmatpush.bf16.xpose.msra.mxu0 0
        %1099 = vmatpush.bf16.xpose.msra.mxu0 0
        %1100 = vmatpush.bf16.xpose.msra.mxu0 0
        %1101 = vmatpush.bf16.xpose.msra.mxu0 %v1092
        %1102 = vmatmul.bf16.gmra.mxu0 %v1089
        %v1103 = vpop.f32.mrf.mxu0
        %v1104 = vadd.f32 0.0, %v1103
        %v1105 = vpop.f32.mrf.mxu0
        %1106 = vdwg.mxu0
        %v1107 = vsel %vm1018, %v1104, -1e+30
        %v1108 = vsel %vm1040, %v1107, -inf
        %1109 = vmax.xlane.f32.xlu0 %v1108
        %v1110 = vpop.xlane.xlu0 %1109
        %v1111 = vmax.f32 %v1110, 0.0
        %v1112 = vsub.f32 %v1107, %v1111
        %v1113 = vmul.f32 %v1112, 1.442695
        %v1114 = vpow.pop %v1113
        %v1115 = vsel %vm1040, %v1114, 0.0
        %1116 = vadd.xlane.f32.xlu0 %v1115
        %v1117 = vpop.xlane.xlu0 %1116
        %v1118 = vsub.f32 0.0, %v1111
        %v1119 = vmul.f32 %v1118, 1.442695
        %v1120 = vpow.pop %v1119
        %v1121 = vadd.f32 %v1117, %v1120
        %v1122 = vrcp.pop %v1121
        %v1123 = vmul.f32 %v1114, %v1122
        %v1124 = vpack.c.bf16 %v1123, %v1123
        %v1126 = vunpack.c.l.b16 %v987
        %v1127 = vpack.c.b16 %v1126, %v1126
        %1128 = vrot.lane.b32.xlu0 %v1127, 96
        %v1129 = vpop.permute.xlu0 %1128
        %v1131 = vsel %vm1040, %v1124, 0
        %v1134 = vsel %vm1061, %v1129, 0
        %1136 = vmatpush.bf16.msra.mxu0 0
        %1137 = vmatpush.bf16.msra.mxu0 0
        %1138 = vmatpush.bf16.msra.mxu0 0
        %1139 = vmatpush.bf16.msra.mxu0 0
        %1140 = vmatpush.bf16.msra.mxu0 0
        %1141 = vmatpush.bf16.msra.mxu0 0
        %1142 = vmatpush.bf16.msra.mxu0 0
        %1143 = vmatpush.bf16.msra.mxu0 %v1134
        %1144 = vmatmul.bf16.gmra.mxu0 %v1131
        %v1145 = vpop.f32.mrf.mxu0
        %v1146 = vadd.f32 0.0, %v1145
        %v1147 = vpop.f32.mrf.mxu0
        %1148 = vdwg.mxu0
        %1149 = vrot.lane.b32.xlu0 %v1080, 64
        %v1150 = vpop.permute.xlu0 %1149
        %1151 = vrot.lane.b32.xlu0 %v1085, 64
        %v1152 = vpop.permute.xlu0 %1151
        %v1154 = vsel %vm1019, %v1150, 0
        %v1157 = vsel %vm1019, %v1152, 0
        %1159 = vmatpush.bf16.xpose.msra.mxu0 0
        %1160 = vmatpush.bf16.xpose.msra.mxu0 0
        %1161 = vmatpush.bf16.xpose.msra.mxu0 0
        %1162 = vmatpush.bf16.xpose.msra.mxu0 0
        %1163 = vmatpush.bf16.xpose.msra.mxu0 0
        %1164 = vmatpush.bf16.xpose.msra.mxu0 0
        %1165 = vmatpush.bf16.xpose.msra.mxu0 0
        %1166 = vmatpush.bf16.xpose.msra.mxu0 %v1157
        %1167 = vmatmul.bf16.gmra.mxu0 %v1154
        %v1168 = vpop.f32.mrf.mxu0
        %v1169 = vadd.f32 0.0, %v1168
        %v1170 = vpop.f32.mrf.mxu0
        %1171 = vdwg.mxu0
        %v1172 = vsel %vm1018, %v1169, -1e+30
        %v1173 = vsel %vm1040, %v1172, -inf
        %1174 = vmax.xlane.f32.xlu0 %v1173
        %v1175 = vpop.xlane.xlu0 %1174
        %v1176 = vmax.f32 %v1175, 0.0
        %v1177 = vsub.f32 %v1172, %v1176
        %v1178 = vmul.f32 %v1177, 1.442695
        %v1179 = vpow.pop %v1178
        %v1180 = vsel %vm1040, %v1179, 0.0
        %1181 = vadd.xlane.f32.xlu0 %v1180
        %v1182 = vpop.xlane.xlu0 %1181
        %v1183 = vsub.f32 0.0, %v1176
        %v1184 = vmul.f32 %v1183, 1.442695
        %v1185 = vpow.pop %v1184
        %v1186 = vadd.f32 %v1182, %v1185
        %v1187 = vrcp.pop %v1186
        %v1188 = vmul.f32 %v1179, %v1187
        %v1189 = vpack.c.bf16 %v1188, %v1188
        %1190 = vrot.lane.b32.xlu0 %v1127, 64
        %v1191 = vpop.permute.xlu0 %1190
        %v1193 = vsel %vm1040, %v1189, 0
        %v1196 = vsel %vm1061, %v1191, 0
        %1198 = vmatpush.bf16.msra.mxu0 0
        %1199 = vmatpush.bf16.msra.mxu0 0
        %1200 = vmatpush.bf16.msra.mxu0 0
        %1201 = vmatpush.bf16.msra.mxu0 0
        %1202 = vmatpush.bf16.msra.mxu0 0
        %1203 = vmatpush.bf16.msra.mxu0 0
        %1204 = vmatpush.bf16.msra.mxu0 0
        %1205 = vmatpush.bf16.msra.mxu0 %v1196
        %1206 = vmatmul.bf16.gmra.mxu0 %v1193
        %v1207 = vpop.f32.mrf.mxu0
        %v1208 = vadd.f32 0.0, %v1207
        %v1209 = vpop.f32.mrf.mxu0
        %1210 = vdwg.mxu0
        %1211 = vrot.lane.b32.xlu0 %v1080, 32
        %v1212 = vpop.permute.xlu0 %1211
        %1213 = vrot.lane.b32.xlu0 %v1085, 32
        %v1214 = vpop.permute.xlu0 %1213
        %v1216 = vsel %vm1019, %v1212, 0
        %v1219 = vsel %vm1019, %v1214, 0
        %1221 = vmatpush.bf16.xpose.msra.mxu0 0
        %1222 = vmatpush.bf16.xpose.msra.mxu0 0
        %1223 = vmatpush.bf16.xpose.msra.mxu0 0
        %1224 = vmatpush.bf16.xpose.msra.mxu0 0
        %1225 = vmatpush.bf16.xpose.msra.mxu0 0
        %1226 = vmatpush.bf16.xpose.msra.mxu0 0
        %1227 = vmatpush.bf16.xpose.msra.mxu0 0
        %1228 = vmatpush.bf16.xpose.msra.mxu0 %v1219
        %1229 = vmatmul.bf16.gmra.mxu0 %v1216
        %v1230 = vpop.f32.mrf.mxu0
        %v1231 = vadd.f32 0.0, %v1230
        %v1232 = vpop.f32.mrf.mxu0
        %1233 = vdwg.mxu0
        %v1234 = vsel %vm1018, %v1231, -1e+30
        %v1235 = vsel %vm1040, %v1234, -inf
        %1236 = vmax.xlane.f32.xlu0 %v1235
        %v1237 = vpop.xlane.xlu0 %1236
        %v1238 = vmax.f32 %v1237, 0.0
        %v1239 = vsub.f32 %v1234, %v1238
        %v1240 = vmul.f32 %v1239, 1.442695
        %v1241 = vpow.pop %v1240
        %v1242 = vsel %vm1040, %v1241, 0.0
        %1243 = vadd.xlane.f32.xlu0 %v1242
        %v1244 = vpop.xlane.xlu0 %1243
        %v1245 = vsub.f32 0.0, %v1238
        %v1246 = vmul.f32 %v1245, 1.442695
        %v1247 = vpow.pop %v1246
        %v1248 = vadd.f32 %v1244, %v1247
        %v1249 = vrcp.pop %v1248
        %v1250 = vmul.f32 %v1241, %v1249
        %v1251 = vpack.c.bf16 %v1250, %v1250
        %1252 = vrot.lane.b32.xlu0 %v1127, 32
        %v1253 = vpop.permute.xlu0 %1252
        %v1255 = vsel %vm1040, %v1251, 0
        %v1258 = vsel %vm1061, %v1253, 0
        %1260 = vmatpush.bf16.msra.mxu0 0
        %1261 = vmatpush.bf16.msra.mxu0 0
        %1262 = vmatpush.bf16.msra.mxu0 0
        %1263 = vmatpush.bf16.msra.mxu0 0
        %1264 = vmatpush.bf16.msra.mxu0 0
        %1265 = vmatpush.bf16.msra.mxu0 0
        %1266 = vmatpush.bf16.msra.mxu0 0
        %1267 = vmatpush.bf16.msra.mxu0 %v1258
        %1268 = vmatmul.bf16.gmra.mxu0 %v1255
        %v1269 = vpop.f32.mrf.mxu0
        %v1270 = vadd.f32 0.0, %v1269
        %v1271 = vpop.f32.mrf.mxu0
        %1272 = vdwg.mxu0
        %1274 = vrot.lane.b32.xlu0 %v1146, 32
        %v1275 = vpop.permute.xlu0 %1274
        %1278 = vrot.lane.b32.xlu0 %v1208, 64
        %v1279 = vpop.permute.xlu0 %1278
        %1282 = vrot.lane.b32.xlu0 %v1270, 96
        %v1283 = vpop.permute.xlu0 %1282
        %v1285 = vsel %vm1019, %v1075, %v1275
        %vm1286 = vcmask 523264
        %v1287 = vsel %vm1286, %v1285, %v1279
        %vm1288 = vcmask 785408
        %v1289 = vsel %vm1288, %v1287, %v1283
        %v1290 = vpack.c.bf16 %v1289, %v1289
        %v1291 = vld [vmem:[#allocation11] sm:$0xf]
        %v1292 = vld [vmem:[#allocation11 + $0x4] sm:$0xf]
        %v1293 = vld [vmem:[#allocation11 + $0x8] sm:$0xf]
        %v1294 = vld [vmem:[#allocation11 + $0xc] sm:$0xf]
        %v1295 = vld [vmem:[#allocation11 + $0x10] sm:$0xf]
        %v1296 = vld [vmem:[#allocation11 + $0x14] sm:$0xf]
        %v1297 = vld [vmem:[#allocation11 + $0x18] sm:$0xf]
        %v1298 = vld [vmem:[#allocation11 + $0x1c] sm:$0xf]
        %v1299 = vld [vmem:[#allocation11 + $0x20] sm:$0xf]
        %v1300 = vld [vmem:[#allocation11 + $0x24] sm:$0xf]
        %v1301 = vld [vmem:[#allocation11 + $0x28] sm:$0xf]
        %v1302 = vld [vmem:[#allocation11 + $0x2c] sm:$0xf]
        %v1303 = vld [vmem:[#allocation11 + $0x30] sm:$0xf]
        %v1304 = vld [vmem:[#allocation11 + $0x34] sm:$0xf]
        %v1305 = vld [vmem:[#allocation11 + $0x38] sm:$0xf]
        %v1306 = vld [vmem:[#allocation11 + $0x3c] sm:$0xf]
        %v1323 = vunpack.c.l.b16 %v1291
        %v1324 = vunpack.c.l.b16 %v1292
        %v1325 = vunpack.c.l.b16 %v1293
        %v1326 = vunpack.c.l.b16 %v1294
        %v1327 = vunpack.c.l.b16 %v1295
        %v1328 = vunpack.c.l.b16 %v1296
        %v1329 = vunpack.c.l.b16 %v1297
        %v1330 = vunpack.c.l.b16 %v1298
        %v1331 = vunpack.c.l.b16 %v1299
        %v1332 = vunpack.c.l.b16 %v1300
        %v1333 = vunpack.c.l.b16 %v1301
        %v1334 = vunpack.c.l.b16 %v1302
        %v1335 = vunpack.c.l.b16 %v1303
        %v1336 = vunpack.c.l.b16 %v1304
        %v1337 = vunpack.c.l.b16 %v1305
        %v1338 = vunpack.c.l.b16 %v1306
        %v1339 = vpack.c.b16 %v1324, %v1323
        %v1340 = vpack.c.b16 %v1326, %v1325
        %v1341 = vpack.c.b16 %v1328, %v1327
        %v1342 = vpack.c.b16 %v1330, %v1329
        %v1343 = vpack.c.b16 %v1332, %v1331
        %v1344 = vpack.c.b16 %v1334, %v1333
        %v1345 = vpack.c.b16 %v1336, %v1335
        %v1346 = vpack.c.b16 %v1338, %v1337
        %1355 = vmatpush.bf16.msra.mxu0 %v1346
        %1356 = vmatpush.bf16.msra.mxu0 %v1345
        %1357 = vmatpush.bf16.msra.mxu0 %v1344
        %1358 = vmatpush.bf16.msra.mxu0 %v1343
        %1359 = vmatpush.bf16.msra.mxu0 %v1342
        %1360 = vmatpush.bf16.msra.mxu0 %v1341
        %1361 = vmatpush.bf16.msra.mxu0 %v1340
        %1362 = vmatpush.bf16.msra.mxu0 %v1339
        %1363 = vmatmul.bf16.gmra.mxu0 %v1290
        %v1364 = vpop.f32.mrf.mxu0
        %v1365 = vadd.f32 0.0, %v1364
        %v1366 = vpop.f32.mrf.mxu0
        %1367 = vdwg.mxu0
        %v1368 = vadd.f32 %v737, %v1365
        %v1369 = vld [vmem:[#allocation13] sm:$0x1]
        %v1371 = vperm.slane %v1369, 0
        %v1373 = vadd.f32 %v1368, %v1371
        %v1374 = vld [vmem:[#allocation14] sm:$0x1]
        %v1375 = vld [vmem:[#allocation16] sm:$0x1]
        %1376 = vadd.xlane.f32.xlu0 %v1373
        %v1377 = vpop.xlane.xlu0 %1376
        %v1378 = vmul.f32 %v1377, %v751
        %v1379 = vsub.f32 %v1373, %v1378
        %v1380 = vmul.f32 %v1379, %v1379
        %1381 = vadd.xlane.f32.xlu0 %v1380
        %v1382 = vpop.xlane.xlu0 %1381
        %v1383 = vmul.f32 %v1382, %v751
        %v1384 = vadd.f32 %v1383, 1e-05
        %v1385 = vrsqrt.pop %v1384
        %v1386 = vmul.f32 %v1385, %v1384
        %v1387 = vmul.f32 %v1386, %v1385
        %v1388 = vmul.f32 0.5, %v1387
        %v1389 = vsub.f32 1.5, %v1388
        %v1390 = vmul.f32 %v1385, %v1389
        %vm1391 = vweird.f32 %v1384
        %vm1392 = vweird.f32 %v1385
        %vm1393 = vmor %vm1391, %vm1392
        %v1394 = vsel %vm1393, %v1385, %v1390
        %v1395 = vmul.f32 %v1379, %v1394
        %v1397 = vperm.slane %v1374, 0
        %v1399 = vmul.f32 %v1395, %v1397
        %v1401 = vperm.slane %v1375, 0
        %v1403 = vadd.f32 %v1399, %v1401
        %v1404 = vpack.c.bf16 %v1403, %v1403
        %v1405 = vld [vmem:[#allocation17] sm:$0xff]
        %v1406 = vld [vmem:[#allocation17 + $0x8] sm:$0xff]
        %v1407 = vld [vmem:[#allocation17 + $0x10] sm:$0xff]
        %v1408 = vld [vmem:[#allocation17 + $0x18] sm:$0xff]
        %v1409 = vld [vmem:[#allocation17 + $0x20] sm:$0xff]
        %v1410 = vld [vmem:[#allocation17 + $0x28] sm:$0xff]
        %v1411 = vld [vmem:[#allocation17 + $0x30] sm:$0xff]
        %v1412 = vld [vmem:[#allocation17 + $0x38] sm:$0xff]
        %v1413 = vld [vmem:[#allocation17 + $0x40] sm:$0xff]
        %v1414 = vld [vmem:[#allocation17 + $0x48] sm:$0xff]
        %v1415 = vld [vmem:[#allocation17 + $0x50] sm:$0xff]
        %v1416 = vld [vmem:[#allocation17 + $0x58] sm:$0xff]
        %v1417 = vld [vmem:[#allocation17 + $0x60] sm:$0xff]
        %v1418 = vld [vmem:[#allocation17 + $0x68] sm:$0xff]
        %v1419 = vld [vmem:[#allocation17 + $0x70] sm:$0xff]
        %v1420 = vld [vmem:[#allocation17 + $0x78] sm:$0xff]
        %v1421 = vld [vmem:[#allocation17 + $0x80] sm:$0xff]
        %v1422 = vld [vmem:[#allocation17 + $0x88] sm:$0xff]
        %v1423 = vld [vmem:[#allocation17 + $0x90] sm:$0xff]
        %v1424 = vld [vmem:[#allocation17 + $0x98] sm:$0xff]
        %v1425 = vld [vmem:[#allocation17 + $0xa0] sm:$0xff]
        %v1426 = vld [vmem:[#allocation17 + $0xa8] sm:$0xff]
        %v1427 = vld [vmem:[#allocation17 + $0xb0] sm:$0xff]
        %v1428 = vld [vmem:[#allocation17 + $0xb8] sm:$0xff]
        %v1429 = vld [vmem:[#allocation17 + $0xc0] sm:$0xff]
        %v1430 = vld [vmem:[#allocation17 + $0xc8] sm:$0xff]
        %v1431 = vld [vmem:[#allocation17 + $0xd0] sm:$0xff]
        %v1432 = vld [vmem:[#allocation17 + $0xd8] sm:$0xff]
        %v1433 = vld [vmem:[#allocation17 + $0xe0] sm:$0xff]
        %v1434 = vld [vmem:[#allocation17 + $0xe8] sm:$0xff]
        %v1435 = vld [vmem:[#allocation17 + $0xf0] sm:$0xff]
        %v1436 = vld [vmem:[#allocation17 + $0xf8] sm:$0xff]
        %v1437 = vld [vmem:[%s10] sm:$0xf]
        %v1439 = vperm.slane %v1437, 0
        %v1440 = vperm.slane %v1437, 1
        %v1441 = vperm.slane %v1437, 2
        %v1442 = vperm.slane %v1437, 3
        %v1479 = vunpack.c.l.b16 %v1405
        %v1480 = vunpack.c.h.b16 %v1405
        %v1481 = vunpack.c.l.b16 %v1406
        %v1482 = vunpack.c.h.b16 %v1406
        %v1483 = vunpack.c.l.b16 %v1407
        %v1484 = vunpack.c.h.b16 %v1407
        %v1485 = vunpack.c.l.b16 %v1408
        %v1486 = vunpack.c.h.b16 %v1408
        %v1487 = vunpack.c.l.b16 %v1409
        %v1488 = vunpack.c.h.b16 %v1409
        %v1489 = vunpack.c.l.b16 %v1410
        %v1490 = vunpack.c.h.b16 %v1410
        %v1491 = vunpack.c.l.b16 %v1411
        %v1492 = vunpack.c.h.b16 %v1411
        %v1493 = vunpack.c.l.b16 %v1412
        %v1494 = vunpack.c.h.b16 %v1412
        %v1495 = vunpack.c.l.b16 %v1413
        %v1496 = vunpack.c.h.b16 %v1413
        %v1497 = vunpack.c.l.b16 %v1414
        %v1498 = vunpack.c.h.b16 %v1414
        %v1499 = vunpack.c.l.b16 %v1415
        %v1500 = vunpack.c.h.b16 %v1415
        %v1501 = vunpack.c.l.b16 %v1416
        %v1502 = vunpack.c.h.b16 %v1416
        %v1503 = vunpack.c.l.b16 %v1417
        %v1504 = vunpack.c.h.b16 %v1417
        %v1505 = vunpack.c.l.b16 %v1418
        %v1506 = vunpack.c.h.b16 %v1418
        %v1507 = vunpack.c.l.b16 %v1419
        %v1508 = vunpack.c.h.b16 %v1419
        %v1509 = vunpack.c.l.b16 %v1420
        %v1510 = vunpack.c.h.b16 %v1420
        %v1511 = vunpack.c.l.b16 %v1421
        %v1512 = vunpack.c.h.b16 %v1421
        %v1513 = vunpack.c.l.b16 %v1422
        %v1514 = vunpack.c.h.b16 %v1422
        %v1515 = vunpack.c.l.b16 %v1423
        %v1516 = vunpack.c.h.b16 %v1423
        %v1517 = vunpack.c.l.b16 %v1424
        %v1518 = vunpack.c.h.b16 %v1424
        %v1519 = vunpack.c.l.b16 %v1425
        %v1520 = vunpack.c.h.b16 %v1425
        %v1521 = vunpack.c.l.b16 %v1426
        %v1522 = vunpack.c.h.b16 %v1426
        %v1523 = vunpack.c.l.b16 %v1427
        %v1524 = vunpack.c.h.b16 %v1427
        %v1525 = vunpack.c.l.b16 %v1428
        %v1526 = vunpack.c.h.b16 %v1428
        %v1527 = vunpack.c.l.b16 %v1429
        %v1528 = vunpack.c.h.b16 %v1429
        %v1529 = vunpack.c.l.b16 %v1430
        %v1530 = vunpack.c.h.b16 %v1430
        %v1531 = vunpack.c.l.b16 %v1431
        %v1532 = vunpack.c.h.b16 %v1431
        %v1533 = vunpack.c.l.b16 %v1432
        %v1534 = vunpack.c.h.b16 %v1432
        %v1535 = vunpack.c.l.b16 %v1433
        %v1536 = vunpack.c.h.b16 %v1433
        %v1537 = vunpack.c.l.b16 %v1434
        %v1538 = vunpack.c.h.b16 %v1434
        %v1539 = vunpack.c.l.b16 %v1435
        %v1540 = vunpack.c.h.b16 %v1435
        %v1541 = vunpack.c.l.b16 %v1436
        %v1542 = vunpack.c.h.b16 %v1436
        %v1543 = vpack.c.b16 %v1483, %v1479
        %v1544 = vpack.c.b16 %v1484, %v1480
        %v1545 = vpack.c.b16 %v1485, %v1481
        %v1546 = vpack.c.b16 %v1486, %v1482
        %v1547 = vpack.c.b16 %v1491, %v1487
        %v1548 = vpack.c.b16 %v1492, %v1488
        %v1549 = vpack.c.b16 %v1493, %v1489
        %v1550 = vpack.c.b16 %v1494, %v1490
        %v1551 = vpack.c.b16 %v1499, %v1495
        %v1552 = vpack.c.b16 %v1500, %v1496
        %v1553 = vpack.c.b16 %v1501, %v1497
        %v1554 = vpack.c.b16 %v1502, %v1498
        %v1555 = vpack.c.b16 %v1507, %v1503
        %v1556 = vpack.c.b16 %v1508, %v1504
        %v1557 = vpack.c.b16 %v1509, %v1505
        %v1558 = vpack.c.b16 %v1510, %v1506
        %v1559 = vpack.c.b16 %v1515, %v1511
        %v1560 = vpack.c.b16 %v1516, %v1512
        %v1561 = vpack.c.b16 %v1517, %v1513
        %v1562 = vpack.c.b16 %v1518, %v1514
        %v1563 = vpack.c.b16 %v1523, %v1519
        %v1564 = vpack.c.b16 %v1524, %v1520
        %v1565 = vpack.c.b16 %v1525, %v1521
        %v1566 = vpack.c.b16 %v1526, %v1522
        %v1567 = vpack.c.b16 %v1531, %v1527
        %v1568 = vpack.c.b16 %v1532, %v1528
        %v1569 = vpack.c.b16 %v1533, %v1529
        %v1570 = vpack.c.b16 %v1534, %v1530
        %v1571 = vpack.c.b16 %v1539, %v1535
        %v1572 = vpack.c.b16 %v1540, %v1536
        %v1573 = vpack.c.b16 %v1541, %v1537
        %v1574 = vpack.c.b16 %v1542, %v1538
        %1607 = vmatpush.bf16.msra.mxu0 %v1571
        %1608 = vmatpush.bf16.msra.mxu0 %v1567
        %1609 = vmatpush.bf16.msra.mxu0 %v1563
        %1610 = vmatpush.bf16.msra.mxu0 %v1559
        %1611 = vmatpush.bf16.msra.mxu0 %v1555
        %1612 = vmatpush.bf16.msra.mxu0 %v1551
        %1613 = vmatpush.bf16.msra.mxu0 %v1547
        %1614 = vmatpush.bf16.msra.mxu0 %v1543
        %1615 = vmatmul.bf16.gmra.mxu0 %v1404
        %v1616 = vpop.f32.mrf.mxu0
        %v1617 = vadd.f32 %v1439, %v1616
        %v1618 = vpop.f32.mrf.mxu0
        %1619 = vdwg.mxu0
        %1620 = vmatpush.bf16.msra.mxu0 %v1572
        %1621 = vmatpush.bf16.msra.mxu0 %v1568
        %1622 = vmatpush.bf16.msra.mxu0 %v1564
        %1623 = vmatpush.bf16.msra.mxu0 %v1560
        %1624 = vmatpush.bf16.msra.mxu0 %v1556
        %1625 = vmatpush.bf16.msra.mxu0 %v1552
        %1626 = vmatpush.bf16.msra.mxu0 %v1548
        %1627 = vmatpush.bf16.msra.mxu0 %v1544
        %1628 = vmatmul.bf16.gmra.mxu0 %v1404
        %v1629 = vpop.f32.mrf.mxu0
        %v1630 = vadd.f32 %v1440, %v1629
        %v1631 = vpop.f32.mrf.mxu0
        %1632 = vdwg.mxu0
        %1633 = vmatpush.bf16.msra.mxu0 %v1573
        %1634 = vmatpush.bf16.msra.mxu0 %v1569
        %1635 = vmatpush.bf16.msra.mxu0 %v1565
        %1636 = vmatpush.bf16.msra.mxu0 %v1561
        %1637 = vmatpush.bf16.msra.mxu0 %v1557
        %1638 = vmatpush.bf16.msra.mxu0 %v1553
        %1639 = vmatpush.bf16.msra.mxu0 %v1549
        %1640 = vmatpush.bf16.msra.mxu0 %v1545
        %1641 = vmatmul.bf16.gmra.mxu0 %v1404
        %v1642 = vpop.f32.mrf.mxu0
        %v1643 = vadd.f32 %v1441, %v1642
        %v1644 = vpop.f32.mrf.mxu0
        %1645 = vdwg.mxu0
        %1646 = vmatpush.bf16.msra.mxu0 %v1574
        %1647 = vmatpush.bf16.msra.mxu0 %v1570
        %1648 = vmatpush.bf16.msra.mxu0 %v1566
        %1649 = vmatpush.bf16.msra.mxu0 %v1562
        %1650 = vmatpush.bf16.msra.mxu0 %v1558
        %1651 = vmatpush.bf16.msra.mxu0 %v1554
        %1652 = vmatpush.bf16.msra.mxu0 %v1550
        %1653 = vmatpush.bf16.msra.mxu0 %v1546
        %1654 = vmatmul.bf16.gmra.mxu0 %v1404
        %v1655 = vpop.f32.mrf.mxu0
        %v1656 = vadd.f32 %v1442, %v1655
        %v1657 = vpop.f32.mrf.mxu0
        %1658 = vdwg.mxu0
        %v1659 = vmul.f32 %v1617, 0.70710677
        %v1660 = vmul.f32 %v1630, 0.70710677
        %v1661 = vmul.f32 %v1643, 0.70710677
        %v1662 = vmul.f32 %v1656, 0.70710677
        %v1663 = vand.u32 2147483647, %v1659
        %v1664 = vand.u32 2147483647, %v1660
        %v1665 = vand.u32 2147483647, %v1661
        %v1666 = vand.u32 2147483647, %v1662
        %v1667 = vmul.f32 %v1663, 0.3275911
        %v1668 = vmul.f32 %v1664, 0.3275911
        %v1669 = vmul.f32 %v1665, 0.3275911
        %v1670 = vmul.f32 %v1666, 0.3275911
        %v1671 = vadd.f32 %v1667, 1.0
        %v1672 = vadd.f32 %v1668, 1.0
        %v1673 = vadd.f32 %v1669, 1.0
        %v1674 = vadd.f32 %v1670, 1.0
        %v1675 = vrcp.pop %v1671
        %v1676 = vmul.f32 %v1671, %v1675
        %v1677 = vsub.f32 1.0, %v1676
        %v1678 = vmul.f32 %v1675, %v1677
        %v1679 = vadd.f32 %v1675, %v1678
        %vm1680 = vweird.f32 %v1671
        %vm1681 = vweird.f32 %v1675
        %vm1682 = vmor %vm1680, %vm1681
        %v1683 = vsel %vm1682, %v1675, %v1679
        %v1684 = vand.u32 2147483647, %v1671
        %vm1685 = vcmp.eq.f32.partialorder %v1684, 8.507059e+37
        %v1686 = vand.u32 %v1671, 2147483648
        %v1687 = vor.u32 1.1754944e-38, %v1686
        %v1688 = vsel %vm1685, %v1687, %v1683
        %v1689 = vmul.f32 1.0, %v1688
        %v1690 = vrcp.pop %v1672
        %v1691 = vmul.f32 %v1672, %v1690
        %v1692 = vsub.f32 1.0, %v1691
        %v1693 = vmul.f32 %v1690, %v1692
        %v1694 = vadd.f32 %v1690, %v1693
        %vm1695 = vweird.f32 %v1672
        %vm1696 = vweird.f32 %v1690
        %vm1697 = vmor %vm1695, %vm1696
        %v1698 = vsel %vm1697, %v1690, %v1694
        %v1699 = vand.u32 2147483647, %v1672
        %vm1700 = vcmp.eq.f32.partialorder %v1699, 8.507059e+37
        %v1701 = vand.u32 %v1672, 2147483648
        %v1702 = vor.u32 1.1754944e-38, %v1701
        %v1703 = vsel %vm1700, %v1702, %v1698
        %v1704 = vmul.f32 1.0, %v1703
        %v1705 = vrcp.pop %v1673
        %v1706 = vmul.f32 %v1673, %v1705
        %v1707 = vsub.f32 1.0, %v1706
        %v1708 = vmul.f32 %v1705, %v1707
        %v1709 = vadd.f32 %v1705, %v1708
        %vm1710 = vweird.f32 %v1673
        %vm1711 = vweird.f32 %v1705
        %vm1712 = vmor %vm1710, %vm1711
        %v1713 = vsel %vm1712, %v1705, %v1709
        %v1714 = vand.u32 2147483647, %v1673
        %vm1715 = vcmp.eq.f32.partialorder %v1714, 8.507059e+37
        %v1716 = vand.u32 %v1673, 2147483648
        %v1717 = vor.u32 1.1754944e-38, %v1716
        %v1718 = vsel %vm1715, %v1717, %v1713
        %v1719 = vmul.f32 1.0, %v1718
        %v1720 = vrcp.pop %v1674
        %v1721 = vmul.f32 %v1674, %v1720
        %v1722 = vsub.f32 1.0, %v1721
        %v1723 = vmul.f32 %v1720, %v1722
        %v1724 = vadd.f32 %v1720, %v1723
        %vm1725 = vweird.f32 %v1674
        %vm1726 = vweird.f32 %v1720
        %vm1727 = vmor %vm1725, %vm1726
        %v1728 = vsel %vm1727, %v1720, %v1724
        %v1729 = vand.u32 2147483647, %v1674
        %vm1730 = vcmp.eq.f32.partialorder %v1729, 8.507059e+37
        %v1731 = vand.u32 %v1674, 2147483648
        %v1732 = vor.u32 1.1754944e-38, %v1731
        %v1733 = vsel %vm1730, %v1732, %v1728
        %v1734 = vmul.f32 1.0, %v1733
        %v1735 = vmul.f32 %v1689, 1.0614054
        %v1736 = vmul.f32 %v1704, 1.0614054
        %v1737 = vmul.f32 %v1719, 1.0614054
        %v1738 = vmul.f32 %v1734, 1.0614054
        %v1739 = vsub.f32 %v1735, 1.4531521
        %v1740 = vsub.f32 %v1736, 1.4531521
        %v1741 = vsub.f32 %v1737, 1.4531521
        %v1742 = vsub.f32 %v1738, 1.4531521
        %v1743 = vmul.f32 %v1739, %v1689
        %v1744 = vmul.f32 %v1740, %v1704
        %v1745 = vmul.f32 %v1741, %v1719
        %v1746 = vmul.f32 %v1742, %v1734
        %v1747 = vadd.f32 %v1743, 1.4214138
        %v1748 = vadd.f32 %v1744, 1.4214138
        %v1749 = vadd.f32 %v1745, 1.4214138
        %v1750 = vadd.f32 %v1746, 1.4214138
        %v1751 = vmul.f32 %v1747, %v1689
        %v1752 = vmul.f32 %v1748, %v1704
        %v1753 = vmul.f32 %v1749, %v1719
        %v1754 = vmul.f32 %v1750, %v1734
        %v1755 = vsub.f32 %v1751, 0.28449672
        %v1756 = vsub.f32 %v1752, 0.28449672
        %v1757 = vsub.f32 %v1753, 0.28449672
        %v1758 = vsub.f32 %v1754, 0.28449672
        %v1759 = vmul.f32 %v1755, %v1689
        %v1760 = vmul.f32 %v1756, %v1704
        %v1761 = vmul.f32 %v1757, %v1719
        %v1762 = vmul.f32 %v1758, %v1734
        %v1763 = vadd.f32 %v1759, 0.2548296
        %v1764 = vadd.f32 %v1760, 0.2548296
        %v1765 = vadd.f32 %v1761, 0.2548296
        %v1766 = vadd.f32 %v1762, 0.2548296
        %v1767 = vmul.f32 %v1763, %v1689
        %v1768 = vmul.f32 %v1764, %v1704
        %v1769 = vmul.f32 %v1765, %v1719
        %v1770 = vmul.f32 %v1766, %v1734
        %v1771 = vsub.f32 0.0, %v1663
        %v1772 = vsub.f32 0.0, %v1664
        %v1773 = vsub.f32 0.0, %v1665
        %v1774 = vsub.f32 0.0, %v1666
        %v1775 = vmul.f32 %v1771, %v1663
        %v1776 = vmul.f32 %v1772, %v1664
        %v1777 = vmul.f32 %v1773, %v1665
        %v1778 = vmul.f32 %v1774, %v1666
        %v1779 = vmul.f32 %v1775, 1.442695
        %v1780 = vpow.pop %v1779
        %v1781 = vmul.f32 %v1776, 1.442695
        %v1782 = vpow.pop %v1781
        %v1783 = vmul.f32 %v1777, 1.442695
        %v1784 = vpow.pop %v1783
        %v1785 = vmul.f32 %v1778, 1.442695
        %v1786 = vpow.pop %v1785
        %v1787 = vmul.f32 %v1767, %v1780
        %v1788 = vmul.f32 %v1768, %v1782
        %v1789 = vmul.f32 %v1769, %v1784
        %v1790 = vmul.f32 %v1770, %v1786
        %v1791 = vsub.f32 1.0, %v1787
        %v1792 = vsub.f32 1.0, %v1788
        %v1793 = vsub.f32 1.0, %v1789
        %v1794 = vsub.f32 1.0, %v1790
        %vm1795 = vcmp.ge.f32.partialorder %v1659, 0.0
        %vm1796 = vcmp.ge.f32.partialorder %v1660, 0.0
        %vm1797 = vcmp.ge.f32.partialorder %v1661, 0.0
        %vm1798 = vcmp.ge.f32.partialorder %v1662, 0.0
        %v1799 = vsub.f32 0.0, %v1791
        %v1800 = vsub.f32 0.0, %v1792
        %v1801 = vsub.f32 0.0, %v1793
        %v1802 = vsub.f32 0.0, %v1794
        %v1803 = vsel %vm1795, %v1791, %v1799
        %v1804 = vsel %vm1796, %v1792, %v1800
        %v1805 = vsel %vm1797, %v1793, %v1801
        %v1806 = vsel %vm1798, %v1794, %v1802
        %v1807 = vmul.f32 %v1617, 0.5
        %v1808 = vmul.f32 %v1630, 0.5
        %v1809 = vmul.f32 %v1643, 0.5
        %v1810 = vmul.f32 %v1656, 0.5
        %v1811 = vadd.f32 %v1803, 1.0
        %v1812 = vadd.f32 %v1804, 1.0
        %v1813 = vadd.f32 %v1805, 1.0
        %v1814 = vadd.f32 %v1806, 1.0
        %v1815 = vmul.f32 %v1807, %v1811
        %v1816 = vmul.f32 %v1808, %v1812
        %v1817 = vmul.f32 %v1809, %v1813
        %v1818 = vmul.f32 %v1810, %v1814
        %v1819 = vpack.c.bf16 %v1815, %v1815
        %v1820 = vpack.c.bf16 %v1816, %v1816
        %v1821 = vpack.c.bf16 %v1817, %v1817
        %v1822 = vpack.c.bf16 %v1818, %v1818
        %v1823 = vld [vmem:[#allocation19] sm:$0xf]
        %v1824 = vld [vmem:[#allocation19 + $0x4] sm:$0xf]
        %v1825 = vld [vmem:[#allocation19 + $0x8] sm:$0xf]
        %v1826 = vld [vmem:[#allocation19 + $0xc] sm:$0xf]
        %v1827 = vld [vmem:[#allocation19 + $0x10] sm:$0xf]
        %v1828 = vld [vmem:[#allocation19 + $0x14] sm:$0xf]
        %v1829 = vld [vmem:[#allocation19 + $0x18] sm:$0xf]
        %v1830 = vld [vmem:[#allocation19 + $0x1c] sm:$0xf]
        %v1831 = vld [vmem:[#allocation19 + $0x20] sm:$0xf]
        %v1832 = vld [vmem:[#allocation19 + $0x24] sm:$0xf]
        %v1833 = vld [vmem:[#allocation19 + $0x28] sm:$0xf]
        %v1834 = vld [vmem:[#allocation19 + $0x2c] sm:$0xf]
        %v1835 = vld [vmem:[#allocation19 + $0x30] sm:$0xf]
        %v1836 = vld [vmem:[#allocation19 + $0x34] sm:$0xf]
        %v1837 = vld [vmem:[#allocation19 + $0x38] sm:$0xf]
        %v1838 = vld [vmem:[#allocation19 + $0x3c] sm:$0xf]
        %v1839 = vld [vmem:[#allocation19 + $0x40] sm:$0xf]
        %v1840 = vld [vmem:[#allocation19 + $0x44] sm:$0xf]
        %v1841 = vld [vmem:[#allocation19 + $0x48] sm:$0xf]
        %v1842 = vld [vmem:[#allocation19 + $0x4c] sm:$0xf]
        %v1843 = vld [vmem:[#allocation19 + $0x50] sm:$0xf]
        %v1844 = vld [vmem:[#allocation19 + $0x54] sm:$0xf]
        %v1845 = vld [vmem:[#allocation19 + $0x58] sm:$0xf]
        %v1846 = vld [vmem:[#allocation19 + $0x5c] sm:$0xf]
        %v1847 = vld [vmem:[#allocation19 + $0x60] sm:$0xf]
        %v1848 = vld [vmem:[#allocation19 + $0x64] sm:$0xf]
        %v1849 = vld [vmem:[#allocation19 + $0x68] sm:$0xf]
        %v1850 = vld [vmem:[#allocation19 + $0x6c] sm:$0xf]
        %v1851 = vld [vmem:[#allocation19 + $0x70] sm:$0xf]
        %v1852 = vld [vmem:[#allocation19 + $0x74] sm:$0xf]
        %v1853 = vld [vmem:[#allocation19 + $0x78] sm:$0xf]
        %v1854 = vld [vmem:[#allocation19 + $0x7c] sm:$0xf]
        %v1855 = vld [vmem:[#allocation19 + $0x80] sm:$0xf]
        %v1856 = vld [vmem:[#allocation19 + $0x84] sm:$0xf]
        %v1857 = vld [vmem:[#allocation19 + $0x88] sm:$0xf]
        %v1858 = vld [vmem:[#allocation19 + $0x8c] sm:$0xf]
        %v1859 = vld [vmem:[#allocation19 + $0x90] sm:$0xf]
        %v1860 = vld [vmem:[#allocation19 + $0x94] sm:$0xf]
        %v1861 = vld [vmem:[#allocation19 + $0x98] sm:$0xf]
        %v1862 = vld [vmem:[#allocation19 + $0x9c] sm:$0xf]
        %v1863 = vld [vmem:[#allocation19 + $0xa0] sm:$0xf]
        %v1864 = vld [vmem:[#allocation19 + $0xa4] sm:$0xf]
        %v1865 = vld [vmem:[#allocation19 + $0xa8] sm:$0xf]
        %v1866 = vld [vmem:[#allocation19 + $0xac] sm:$0xf]
        %v1867 = vld [vmem:[#allocation19 + $0xb0] sm:$0xf]
        %v1868 = vld [vmem:[#allocation19 + $0xb4] sm:$0xf]
        %v1869 = vld [vmem:[#allocation19 + $0xb8] sm:$0xf]
        %v1870 = vld [vmem:[#allocation19 + $0xbc] sm:$0xf]
        %v1871 = vld [vmem:[#allocation19 + $0xc0] sm:$0xf]
        %v1872 = vld [vmem:[#allocation19 + $0xc4] sm:$0xf]
        %v1873 = vld [vmem:[#allocation19 + $0xc8] sm:$0xf]
        %v1874 = vld [vmem:[#allocation19 + $0xcc] sm:$0xf]
        %v1875 = vld [vmem:[#allocation19 + $0xd0] sm:$0xf]
        %v1876 = vld [vmem:[#allocation19 + $0xd4] sm:$0xf]
        %v1877 = vld [vmem:[#allocation19 + $0xd8] sm:$0xf]
        %v1878 = vld [vmem:[#allocation19 + $0xdc] sm:$0xf]
        %v1879 = vld [vmem:[#allocation19 + $0xe0] sm:$0xf]
        %v1880 = vld [vmem:[#allocation19 + $0xe4] sm:$0xf]
        %v1881 = vld [vmem:[#allocation19 + $0xe8] sm:$0xf]
        %v1882 = vld [vmem:[#allocation19 + $0xec] sm:$0xf]
        %v1883 = vld [vmem:[#allocation19 + $0xf0] sm:$0xf]
        %v1884 = vld [vmem:[#allocation19 + $0xf4] sm:$0xf]
        %v1885 = vld [vmem:[#allocation19 + $0xf8] sm:$0xf]
        %v1886 = vld [vmem:[#allocation19 + $0xfc] sm:$0xf]
        %v1887 = vld [vmem:[#allocation20] sm:$0x1]
        %v1889 = vperm.slane %v1887, 0
        %v1955 = vunpack.c.l.b16 %v1823
        %v1956 = vunpack.c.l.b16 %v1824
        %v1957 = vunpack.c.l.b16 %v1825
        %v1958 = vunpack.c.l.b16 %v1826
        %v1959 = vunpack.c.l.b16 %v1827
        %v1960 = vunpack.c.l.b16 %v1828
        %v1961 = vunpack.c.l.b16 %v1829
        %v1962 = vunpack.c.l.b16 %v1830
        %v1963 = vunpack.c.l.b16 %v1831
        %v1964 = vunpack.c.l.b16 %v1832
        %v1965 = vunpack.c.l.b16 %v1833
        %v1966 = vunpack.c.l.b16 %v1834
        %v1967 = vunpack.c.l.b16 %v1835
        %v1968 = vunpack.c.l.b16 %v1836
        %v1969 = vunpack.c.l.b16 %v1837
        %v1970 = vunpack.c.l.b16 %v1838
        %v1971 = vunpack.c.l.b16 %v1839
        %v1972 = vunpack.c.l.b16 %v1840
        %v1973 = vunpack.c.l.b16 %v1841
        %v1974 = vunpack.c.l.b16 %v1842
        %v1975 = vunpack.c.l.b16 %v1843
        %v1976 = vunpack.c.l.b16 %v1844
        %v1977 = vunpack.c.l.b16 %v1845
        %v1978 = vunpack.c.l.b16 %v1846
        %v1979 = vunpack.c.l.b16 %v1847
        %v1980 = vunpack.c.l.b16 %v1848
        %v1981 = vunpack.c.l.b16 %v1849
        %v1982 = vunpack.c.l.b16 %v1850
        %v1983 = vunpack.c.l.b16 %v1851
        %v1984 = vunpack.c.l.b16 %v1852
        %v1985 = vunpack.c.l.b16 %v1853
        %v1986 = vunpack.c.l.b16 %v1854
        %v1987 = vunpack.c.l.b16 %v1855
        %v1988 = vunpack.c.l.b16 %v1856
        %v1989 = vunpack.c.l.b16 %v1857
        %v1990 = vunpack.c.l.b16 %v1858
        %v1991 = vunpack.c.l.b16 %v1859
        %v1992 = vunpack.c.l.b16 %v1860
        %v1993 = vunpack.c.l.b16 %v1861
        %v1994 = vunpack.c.l.b16 %v1862
        %v1995 = vunpack.c.l.b16 %v1863
        %v1996 = vunpack.c.l.b16 %v1864
        %v1997 = vunpack.c.l.b16 %v1865
        %v1998 = vunpack.c.l.b16 %v1866
        %v1999 = vunpack.c.l.b16 %v1867
        %v2000 = vunpack.c.l.b16 %v1868
        %v2001 = vunpack.c.l.b16 %v1869
        %v2002 = vunpack.c.l.b16 %v1870
        %v2003 = vunpack.c.l.b16 %v1871
        %v2004 = vunpack.c.l.b16 %v1872
        %v2005 = vunpack.c.l.b16 %v1873
        %v2006 = vunpack.c.l.b16 %v1874
        %v2007 = vunpack.c.l.b16 %v1875
        %v2008 = vunpack.c.l.b16 %v1876
        %v2009 = vunpack.c.l.b16 %v1877
        %v2010 = vunpack.c.l.b16 %v1878
        %v2011 = vunpack.c.l.b16 %v1879
        %v2012 = vunpack.c.l.b16 %v1880
        %v2013 = vunpack.c.l.b16 %v1881
        %v2014 = vunpack.c.l.b16 %v1882
        %v2015 = vunpack.c.l.b16 %v1883
        %v2016 = vunpack.c.l.b16 %v1884
        %v2017 = vunpack.c.l.b16 %v1885
        %v2018 = vunpack.c.l.b16 %v1886
        %v2019 = vpack.c.b16 %v1956, %v1955
        %v2020 = vpack.c.b16 %v1958, %v1957
        %v2021 = vpack.c.b16 %v1960, %v1959
        %v2022 = vpack.c.b16 %v1962, %v1961
        %v2023 = vpack.c.b16 %v1964, %v1963
        %v2024 = vpack.c.b16 %v1966, %v1965
        %v2025 = vpack.c.b16 %v1968, %v1967
        %v2026 = vpack.c.b16 %v1970, %v1969
        %v2027 = vpack.c.b16 %v1972, %v1971
        %v2028 = vpack.c.b16 %v1974, %v1973
        %v2029 = vpack.c.b16 %v1976, %v1975
        %v2030 = vpack.c.b16 %v1978, %v1977
        %v2031 = vpack.c.b16 %v1980, %v1979
        %v2032 = vpack.c.b16 %v1982, %v1981
        %v2033 = vpack.c.b16 %v1984, %v1983
        %v2034 = vpack.c.b16 %v1986, %v1985
        %v2035 = vpack.c.b16 %v1988, %v1987
        %v2036 = vpack.c.b16 %v1990, %v1989
        %v2037 = vpack.c.b16 %v1992, %v1991
        %v2038 = vpack.c.b16 %v1994, %v1993
        %v2039 = vpack.c.b16 %v1996, %v1995
        %v2040 = vpack.c.b16 %v1998, %v1997
        %v2041 = vpack.c.b16 %v2000, %v1999
        %v2042 = vpack.c.b16 %v2002, %v2001
        %v2043 = vpack.c.b16 %v2004, %v2003
        %v2044 = vpack.c.b16 %v2006, %v2005
        %v2045 = vpack.c.b16 %v2008, %v2007
        %v2046 = vpack.c.b16 %v2010, %v2009
        %v2047 = vpack.c.b16 %v2012, %v2011
        %v2048 = vpack.c.b16 %v2014, %v2013
        %v2049 = vpack.c.b16 %v2016, %v2015
        %v2050 = vpack.c.b16 %v2018, %v2017
        %2083 = vmatpush.bf16.msra.mxu0 %v2026
        %2084 = vmatpush.bf16.msra.mxu0 %v2025
        %2085 = vmatpush.bf16.msra.mxu0 %v2024
        %2086 = vmatpush.bf16.msra.mxu0 %v2023
        %2087 = vmatpush.bf16.msra.mxu0 %v2022
        %2088 = vmatpush.bf16.msra.mxu0 %v2021
        %2089 = vmatpush.bf16.msra.mxu0 %v2020
        %2090 = vmatpush.bf16.msra.mxu0 %v2019
        %2091 = vmatmul.bf16.gmra.mxu0 %v1819
        %v2092 = vpop.f32.mrf.mxu0
        %v2093 = vadd.f32 %v1889, %v2092
        %v2094 = vpop.f32.mrf.mxu0
        %2095 = vdwg.mxu0
        %2096 = vmatpush.bf16.msra.mxu0 %v2034
        %2097 = vmatpush.bf16.msra.mxu0 %v2033
        %2098 = vmatpush.bf16.msra.mxu0 %v2032
        %2099 = vmatpush.bf16.msra.mxu0 %v2031
        %2100 = vmatpush.bf16.msra.mxu0 %v2030
        %2101 = vmatpush.bf16.msra.mxu0 %v2029
        %2102 = vmatpush.bf16.msra.mxu0 %v2028
        %2103 = vmatpush.bf16.msra.mxu0 %v2027
        %2104 = vmatmul.bf16.gmra.mxu0 %v1820
        %v2105 = vpop.f32.mrf.mxu0
        %v2106 = vadd.f32 %v2093, %v2105
        %v2107 = vpop.f32.mrf.mxu0
        %2108 = vdwg.mxu0
        %2109 = vmatpush.bf16.msra.mxu0 %v2042
        %2110 = vmatpush.bf16.msra.mxu0 %v2041
        %2111 = vmatpush.bf16.msra.mxu0 %v2040
        %2112 = vmatpush.bf16.msra.mxu0 %v2039
        %2113 = vmatpush.bf16.msra.mxu0 %v2038
        %2114 = vmatpush.bf16.msra.mxu0 %v2037
        %2115 = vmatpush.bf16.msra.mxu0 %v2036
        %2116 = vmatpush.bf16.msra.mxu0 %v2035
        %2117 = vmatmul.bf16.gmra.mxu0 %v1821
        %v2118 = vpop.f32.mrf.mxu0
        %v2119 = vadd.f32 %v2106, %v2118
        %v2120 = vpop.f32.mrf.mxu0
        %2121 = vdwg.mxu0
        %2122 = vmatpush.bf16.msra.mxu0 %v2050
        %2123 = vmatpush.bf16.msra.mxu0 %v2049
        %2124 = vmatpush.bf16.msra.mxu0 %v2048
        %2125 = vmatpush.bf16.msra.mxu0 %v2047
        %2126 = vmatpush.bf16.msra.mxu0 %v2046
        %2127 = vmatpush.bf16.msra.mxu0 %v2045
        %2128 = vmatpush.bf16.msra.mxu0 %v2044
        %2129 = vmatpush.bf16.msra.mxu0 %v2043
        %2130 = vmatmul.bf16.gmra.mxu0 %v1822
        %v2131 = vpop.f32.mrf.mxu0
        %v2132 = vadd.f32 %v2119, %v2131
        %v2133 = vpop.f32.mrf.mxu0
        %2134 = vdwg.mxu0
        %v2135 = vadd.f32 %v1373, %v2132
        %2136 = vst [vmem:[%s735] sm:$0xff] %v2135
        %s2137 = sand.u32 %s389, 1
        %s2138 = scalar_lea.sflag [#allocation4], %s2137
        %s2139 = sand.u32 %s389, 1
        %s2140 = smul.addr %s2139, 8
        %s2141 = scalar_lea.vmem [#allocation25], %s2140
        // Predicated region
        $region141: #{tpu_custom_call.1} parent=83 // pred_check
          %p2142 = pneg %p399
        $region142: #{tpu_custom_call.1} parent=83 // pred_check_branch
          %2144 = sbr.rel (%p2142) target = $region144
        $region143: #{tpu_custom_call.1} parent=83 // pred_region
          %2146 = vsyncadd %s2138, 0
          %s2147 = smul.addr %s40, 8
          %s2148 = scalar_lea.hbm %s16, %s2147
          %s2150 = sshll.u32 %s2141, 4
          %s2151 = int_to_ptr.vmem [resolvable:$true] %s2150
          %s2152 = sshll.u32 %s2148, 4
          %s2153 = int_to_ptr.hbm [resolvable:$true] %s2152
          %2155 = dma.vmem_to_hbm [thread:$0]  %s2151, 128, %s2153, %s2138
        $region144: #{tpu_custom_call.1} parent=83 // pred_fallthru
          _
      $region84: #{tpu_custom_call.1} parent=5 // pred_fallthru
        _
      %p2156 = scmp.le.s32.totalorder 2, %s35
      // Predicated region
      $region145: #{tpu_custom_call.1} parent=5 // pred_check
        %p2157 = pneg %p2156
      $region146: #{tpu_custom_call.1} parent=5 // pred_check_branch
        %2159 = sbr.rel (%p2157) target = $region148
      $region147: #{tpu_custom_call.1} parent=5 // pred_region
        %s2160 = ssub.s32 %s35, 2
        // Predicated region
        $region149: #{tpu_custom_call.1} parent=147 // pred_check
          %p2161 = pneg %p405
        $region150: #{tpu_custom_call.1} parent=147 // pred_check_branch
          %2163 = sbr.rel (%p2161) target = $region152
        $region151: #{tpu_custom_call.1} parent=147 // pred_region
          %s2164 = sand.u32 %s390, 1
          %s2165 = scalar_lea.sflag [#allocation4], %s2164
          %s2166 = sand.u32 %s390, 1
          %s2167 = smul.addr %s2166, 8
          %s2168 = scalar_lea.vmem [#allocation25], %s2167
          %2170 = dma.done %s2165, 128
        $region152: #{tpu_custom_call.1} parent=147 // pred_fallthru
          _
      $region148: #{tpu_custom_call.1} parent=5 // pred_fallthru
        _
    $region6: #{tpu_custom_call.1} parent=1 // loop_footer
      %s39 = sadd.s32 1, %s35
    $region7: #{tpu_custom_call.1} parent=1 // loop_footer_branch
      %34 = sbr.rel target = $region3
    $region8: #{tpu_custom_call.1} parent=1 // loop_exit
      _
    %2171 = vsyncpa [#allocation3], 1
    %s2172 = scalar_lea.sflag [#allocation3], 1
    %2173 = vsyncpa %s2172, 1
    %2174 = vsyncpa [#allocation6], 1
    %2175 = vsyncpa [#allocation9], 1
    %2176 = vsyncpa [#allocation12], 1
    %2177 = vsyncpa [#allocation15], 1
    %2178 = vsyncpa [#allocation18], 1
    %2179 = vsyncpa [#allocation21], 1
    %2180 = vsyncpa [#allocation24], 1
    %2181 = vsyncpa [#allocation4], 1
    %s2182 = scalar_lea.sflag [#allocation4], 1
    %2183 = vsyncpa %s2182, 1

</llo_original>
